<compile_context>
chip_gen: v5e
topology: v5e:2x2
jax: 0.10.0
libtpu: 0.0.40
codegen_flags: <defaults>
</compile_context>

<pallas_src>
import functools

import jax
import jax.numpy as jnp
from jax.experimental import pallas as pl
from jax.experimental.pallas import tpu as pltpu


def _activation(name):
    if name == "relu":
        return lambda x: jnp.maximum(x, 0.0)
    if name == "sigmoid":
        return jax.nn.sigmoid
    if name == "tanh":
        return jnp.tanh
    if name == "leaky_relu":
        return lambda x: jnp.where(x > 0, x, 0.01 * x)  # PyTorch default slope 0.01
    raise ValueError(name)


def _round_up(n, m):
    return ((n + m - 1) // m) * m


def _mlp_kernel(n_linear, act_name, mm_precision, x_ref, *refs):
    """Fused MLP forward on one batch tile.

    refs = (w0, b0, w1, b1, ..., w_out, b_out, out_ref)
    Hidden layers: activation(x @ w + b); Dropout(p=0.0) is a no-op.
    Output layer : sigmoid(x @ w + b).
    """
    out_ref = refs[-1]
    act = _activation(act_name)

    h = x_ref[...]
    for i in range(n_linear):
        w = refs[2 * i][...]                           # native dtype -> MXU
        b = refs[2 * i + 1][...].astype(jnp.float32)   # (1, out) -> broadcasts
        lhs = h if h.dtype == w.dtype else h.astype(w.dtype)
        h = jnp.dot(lhs, w, preferred_element_type=jnp.float32,
                    precision=mm_precision) + b        # f32 accumulate
        if i < n_linear - 1:
            h = act(h)                                 # f32 elementwise (v5e-safe)
        else:
            h = jax.nn.sigmoid(h)
    out_ref[...] = h.astype(out_ref.dtype)


def classifier_forward(x, params, activation_function_name, *, use_bf16=False):
    """x: [B, input_size]; params: list of (w [in,out], b [out]) incl. output layer."""
    n_linear = len(params)
    B, in_size = x.shape
    out_size = params[-1][0].shape[1]

    if use_bf16:
        # TODO(synk): in a real model, cast weights once at load time, not per call.
        x = x.astype(jnp.bfloat16)
        params = [(w.astype(jnp.bfloat16), b.astype(jnp.float32)) for w, b in params]
        mm_precision = None
    else:
        mm_precision = jax.lax.Precision.HIGHEST

    itemsize = jnp.dtype(x.dtype).itemsize
    sublane = {4: 8, 2: 16, 1: 32}.get(itemsize, 8)

    # ---- batch tiling ------------------------------------------------------
    MAX_TILE = 1024                      # amortizes ~0.35us/step; v5e mem-bound win
    if B <= sublane:
        tile_b = sublane                 # one tiny tile; megacore irrelevant here
    else:
        n_target = max(2, -(-B // MAX_TILE))   # >=2 tiles so v7x's 2 TCs both work
        tile_b = min(MAX_TILE, _round_up(-(-B // n_target), sublane))
    b_pad = _round_up(B, tile_b)
    n_tiles = b_pad // tile_b

    # Only the batch dim is ever padded (bounded waste by construction above).
    x_in = x if b_pad == B else jnp.pad(x, ((0, b_pad - B), (0, 0)))

    # ---- flat inputs (no feature padding; weights passed as full blocks) ---
    flat_inputs = [x_in]
    weight_bytes = 0
    biases2d = []
    for w, b in params:
        b2 = b.reshape(1, -1)
        biases2d.append(b2)
        flat_inputs += [w, b2]
        weight_bytes += w.size * w.dtype.itemsize + b2.size * b2.dtype.itemsize

    max_feat = max([in_size, out_size] + [w.shape[1] for w, _ in params])

    def _vmem_limit(weight_buf_count):
        need = (weight_buf_count * weight_bytes
                + 2 * tile_b * in_size * itemsize        # double-buffered x tiles
                + 2 * tile_b * out_size * itemsize       # double-buffered out tiles
                + 2 * tile_b * max_feat * 4)             # f32 activation temporaries
        cap = 64 * 2**20                                  # conservative (v7x) default
        try:
            cap = int(pltpu.get_tpu_info().vmem_capacity_bytes)
        except Exception:
            pass
        return int(min(max(int(1.5 * need), 32 * 2**20), int(0.85 * cap)))

    kernel = functools.partial(_mlp_kernel, n_linear, activation_function_name,
                               mm_precision)

    def _build_in_specs(single_buffer_weights):
        specs = [pl.BlockSpec((tile_b, in_size), lambda i: (i, 0))]
        for (w, _), b2 in zip(params, biases2d):
            if single_buffer_weights:
                # Constant block index across the grid -> resident; 1x VMEM cost.
                specs += [
                    pl.BlockSpec(w.shape, lambda i: (0, 0),
                                 pipeline_mode=pl.Buffered(1)),
                    pl.BlockSpec(b2.shape, lambda i: (0, 0),
                                 pipeline_mode=pl.Buffered(1)),
                ]
            else:
                specs += [
                    pl.BlockSpec(w.shape, lambda i: (0, 0)),
                    pl.BlockSpec(b2.shape, lambda i: (0, 0)),
                ]
        return specs

    def _run(single_buffer_weights):
        out = pl.pallas_call(
            kernel,
            out_shape=jax.ShapeDtypeStruct((b_pad, out_size), x_in.dtype),
            grid=(n_tiles,),
            in_specs=_build_in_specs(single_buffer_weights),
            # Narrow (out_size < 128) output block: masked stores, but far fewer
            # HBM bytes than a 128-lane pad + post-call slice for tiny out_size.
            out_specs=pl.BlockSpec((tile_b, out_size), lambda i: (i, 0)),
            compiler_params=pltpu.CompilerParams(
                dimension_semantics=("parallel",),   # batch tiles -> megacore
                vmem_limit_bytes=_vmem_limit(1 if single_buffer_weights else 2),
            ),
        )(*flat_inputs)
        return jax.block_until_ready(out)   # surface compile errors inside try

    if hasattr(pl, "Buffered"):
        try:
            out_p = _run(True)
        except Exception:
            out_p = _run(False)              # robust fallback: default buffering
    else:
        out_p = _run(False)

    return out_p if b_pad == B else out_p[:B]


def init_params(key, input_size, hidden_size, n_layers, output_size, dtype=jnp.float32):
    """Deterministic init mirroring nn.Linear shapes (weights stored as [in, out])."""
    params = []
    sizes_in = [input_size] + [hidden_size] * max(n_layers - 1, 0)
    layer_dims = [(sizes_in[i], hidden_size) for i in range(n_layers)]
    layer_dims.append((hidden_size, output_size))
    for (fan_in, fan_out) in layer_dims:
        key, kw, kb = jax.random.split(key, 3)
        bound = 1.0 / jnp.sqrt(jnp.float32(fan_in))
        w = jax.random.uniform(kw, (fan_in, fan_out), dtype, -bound, bound)
        b = jax.random.uniform(kb, (fan_out,), dtype, -bound, bound)
        params.append((w, b))
    return params


def reference_forward(x, params, activation_function_name):
    act = _activation(activation_function_name)
    h = x
    for i, (w, b) in enumerate(params):
        h = jnp.dot(h, w, precision=jax.lax.Precision.HIGHEST) + b
        h = act(h) if i < len(params) - 1 else jax.nn.sigmoid(h)
    return h


if __name__ == "__main__":
    # Small, module-consistent config (x: [batch, input_size]).
    batch, input_size, hidden_size, n_layers, output_size = 8, 32, 32, 2, 4
    activation_name = "relu"

    key = jax.random.PRNGKey(0)
    key, kx = jax.random.split(key)
    x = jax.random.normal(kx, (batch, input_size), jnp.float32)
    params = init_params(key, input_size, hidden_size, n_layers, output_size)

    out = classifier_forward(x, params, activation_name)
    out = jax.block_until_ready(out)

    ref = reference_forward(x, params, activation_name)
    assert out.shape == (batch, output_size)
    assert jnp.allclose(out, ref, atol=1e-4, rtol=1e-4), "mismatch vs JAX reference"

    print("KERNEL_OK")
</pallas_src>

<mosaic_0001>
module attributes {stable_mosaic.version = 11 : i64} {
  func.func @_mlp_kernel(%arg0: i32, %arg1: memref<8x32xf32, #tpu.memory_space<vmem>>, %arg2: memref<32x32xf32, #tpu.memory_space<vmem>>, %arg3: memref<1x32xf32, #tpu.memory_space<vmem>>, %arg4: memref<32x32xf32, #tpu.memory_space<vmem>>, %arg5: memref<1x32xf32, #tpu.memory_space<vmem>>, %arg6: memref<32x4xf32, #tpu.memory_space<vmem>>, %arg7: memref<1x4xf32, #tpu.memory_space<vmem>>, %arg8: memref<8x4xf32, #tpu.memory_space<vmem>>) attributes {dimension_semantics = [#tpu.dimension_semantics<parallel>], iteration_bounds = array<i64: 1>, scalar_prefetch = 0 : i64, scratch_operands = 0 : i64, tpu.core_type = #tpu.core_type<tc>, window_params = [{transform_indices = @transform_0, window_bounds = array<i64: 8, 32>}, {pipeline_mode = #tpu.pipeline_mode<synchronous>, transform_indices = @transform_1, window_bounds = array<i64: 32, 32>}, {pipeline_mode = #tpu.pipeline_mode<synchronous>, transform_indices = @transform_2, window_bounds = array<i64: 1, 32>}, {pipeline_mode = #tpu.pipeline_mode<synchronous>, transform_indices = @transform_3, window_bounds = array<i64: 32, 32>}, {pipeline_mode = #tpu.pipeline_mode<synchronous>, transform_indices = @transform_4, window_bounds = array<i64: 1, 32>}, {pipeline_mode = #tpu.pipeline_mode<synchronous>, transform_indices = @transform_5, window_bounds = array<i64: 32, 4>}, {pipeline_mode = #tpu.pipeline_mode<synchronous>, transform_indices = @transform_6, window_bounds = array<i64: 1, 4>}, {transform_indices = @transform_7, window_bounds = array<i64: 8, 4>}]} {
    %c0 = arith.constant 0 : index
    %c0_0 = arith.constant 0 : index
    %0 = vector.load %arg1[%c0, %c0_0] : memref<8x32xf32, #tpu.memory_space<vmem>>, vector<8x32xf32>
    %c0_1 = arith.constant 0 : index
    %c0_2 = arith.constant 0 : index
    %1 = vector.load %arg2[%c0_1, %c0_2] : memref<32x32xf32, #tpu.memory_space<vmem>>, vector<32x32xf32>
    %c0_3 = arith.constant 0 : index
    %c0_4 = arith.constant 0 : index
    %2 = vector.load %arg3[%c0_3, %c0_4] : memref<1x32xf32, #tpu.memory_space<vmem>>, vector<1x32xf32>
    %cst = arith.constant dense<0.000000e+00> : vector<8x32xf32>
    %3 = tpu.matmul %0, %1, %cst {dimension_numbers = #tpu.dot_dimension_numbers<[1], [0], [0], [1], [0, 0, 1, 1], [], []>, precision = #tpu.contract_precision<fp32>} : vector<8x32xf32>, vector<32x32xf32>, vector<8x32xf32> -> vector<8x32xf32>
    %4 = vector.broadcast %2 : vector<1x32xf32> to vector<8x32xf32>
    %5 = arith.addf %3, %4 : vector<8x32xf32>
    %cst_5 = arith.constant 0.000000e+00 : f32
    %6 = vector.broadcast %cst_5 : f32 to vector<8x32xf32>
    %7 = arith.maximumf %5, %6 : vector<8x32xf32>
    %c0_6 = arith.constant 0 : index
    %c0_7 = arith.constant 0 : index
    %8 = vector.load %arg4[%c0_6, %c0_7] : memref<32x32xf32, #tpu.memory_space<vmem>>, vector<32x32xf32>
    %c0_8 = arith.constant 0 : index
    %c0_9 = arith.constant 0 : index
    %9 = vector.load %arg5[%c0_8, %c0_9] : memref<1x32xf32, #tpu.memory_space<vmem>>, vector<1x32xf32>
    %cst_10 = arith.constant dense<0.000000e+00> : vector<8x32xf32>
    %10 = tpu.matmul %7, %8, %cst_10 {dimension_numbers = #tpu.dot_dimension_numbers<[1], [0], [0], [1], [0, 0, 1, 1], [], []>, precision = #tpu.contract_precision<fp32>} : vector<8x32xf32>, vector<32x32xf32>, vector<8x32xf32> -> vector<8x32xf32>
    %11 = vector.broadcast %9 : vector<1x32xf32> to vector<8x32xf32>
    %12 = arith.addf %10, %11 : vector<8x32xf32>
    %cst_11 = arith.constant 0.000000e+00 : f32
    %13 = vector.broadcast %cst_11 : f32 to vector<8x32xf32>
    %14 = arith.maximumf %12, %13 : vector<8x32xf32>
    %c0_12 = arith.constant 0 : index
    %c0_13 = arith.constant 0 : index
    %15 = vector.load %arg6[%c0_12, %c0_13] : memref<32x4xf32, #tpu.memory_space<vmem>>, vector<32x4xf32>
    %c0_14 = arith.constant 0 : index
    %c0_15 = arith.constant 0 : index
    %16 = vector.load %arg7[%c0_14, %c0_15] : memref<1x4xf32, #tpu.memory_space<vmem>>, vector<1x4xf32>
    %cst_16 = arith.constant dense<0.000000e+00> : vector<8x4xf32>
    %17 = tpu.matmul %14, %15, %cst_16 {dimension_numbers = #tpu.dot_dimension_numbers<[1], [0], [0], [1], [0, 0, 1, 1], [], []>, precision = #tpu.contract_precision<fp32>} : vector<8x32xf32>, vector<32x4xf32>, vector<8x4xf32> -> vector<8x4xf32>
    %18 = vector.broadcast %16 : vector<1x4xf32> to vector<8x4xf32>
    %19 = arith.addf %17, %18 : vector<8x4xf32>
    %20 = arith.negf %19 : vector<8x4xf32>
    %21 = math.exp %20 : vector<8x4xf32>
    %cst_17 = arith.constant 1.000000e+00 : f32
    %22 = vector.broadcast %cst_17 : f32 to vector<8x4xf32>
    %23 = arith.addf %22, %21 : vector<8x4xf32>
    %24 = arith.divf %22, %23 : vector<8x4xf32>
    %c0_18 = arith.constant 0 : index
    %c0_19 = arith.constant 0 : index
    %25 = vector.load %arg8[%c0_18, %c0_19] : memref<8x4xf32, #tpu.memory_space<vmem>>, vector<8x4xf32>
    tpu.vector_store %arg8[%c0_18, %c0_19], %24 {strides = array<i32>} : memref<8x4xf32, #tpu.memory_space<vmem>>, vector<8x4xf32>,
    return
  }
  func.func @transform_0(%arg0: i32) -> (i32, i32) {
    %c0_i32 = arith.constant 0 : i32
    %c0_i32_0 = arith.constant 0 : i32
    return %arg0, %c0_i32 : i32, i32
  }
  func.func @transform_1(%arg0: i32) -> (i32, i32) {
    %c0_i32 = arith.constant 0 : i32
    %c0_i32_0 = arith.constant 0 : i32
    %c0_i32_1 = arith.constant 0 : i32
    return %c0_i32, %c0_i32_0 : i32, i32
  }
  func.func @transform_2(%arg0: i32) -> (i32, i32) {
    %c0_i32 = arith.constant 0 : i32
    %c0_i32_0 = arith.constant 0 : i32
    %c0_i32_1 = arith.constant 0 : i32
    return %c0_i32, %c0_i32_0 : i32, i32
  }
  func.func @transform_3(%arg0: i32) -> (i32, i32) {
    %c0_i32 = arith.constant 0 : i32
    %c0_i32_0 = arith.constant 0 : i32
    %c0_i32_1 = arith.constant 0 : i32
    return %c0_i32, %c0_i32_0 : i32, i32
  }
  func.func @transform_4(%arg0: i32) -> (i32, i32) {
    %c0_i32 = arith.constant 0 : i32
    %c0_i32_0 = arith.constant 0 : i32
    %c0_i32_1 = arith.constant 0 : i32
    return %c0_i32, %c0_i32_0 : i32, i32
  }
  func.func @transform_5(%arg0: i32) -> (i32, i32) {
    %c0_i32 = arith.constant 0 : i32
    %c0_i32_0 = arith.constant 0 : i32
    %c0_i32_1 = arith.constant 0 : i32
    return %c0_i32, %c0_i32_0 : i32, i32
  }
  func.func @transform_6(%arg0: i32) -> (i32, i32) {
    %c0_i32 = arith.constant 0 : i32
    %c0_i32_0 = arith.constant 0 : i32
    %c0_i32_1 = arith.constant 0 : i32
    return %c0_i32, %c0_i32_0 : i32, i32
  }
  func.func @transform_7(%arg0: i32) -> (i32, i32) {
    %c0_i32 = arith.constant 0 : i32
    %c0_i32_0 = arith.constant 0 : i32
    return %arg0, %c0_i32 : i32, i32
  }
}

module attributes {stable_mosaic.version = 11 : i64} {
  func.func @_mlp_kernel(%arg0: i32, %arg1: memref<8x32xf32, #tpu.memory_space<vmem>>, %arg2: memref<32x32xf32, #tpu.memory_space<vmem>>, %arg3: memref<1x32xf32, #tpu.memory_space<vmem>>, %arg4: memref<32x32xf32, #tpu.memory_space<vmem>>, %arg5: memref<1x32xf32, #tpu.memory_space<vmem>>, %arg6: memref<32x4xf32, #tpu.memory_space<vmem>>, %arg7: memref<1x4xf32, #tpu.memory_space<vmem>>, %arg8: memref<8x4xf32, #tpu.memory_space<vmem>>) attributes {dimension_semantics = [#tpu.dimension_semantics<parallel>], iteration_bounds = array<i64: 1>, scalar_prefetch = 0 : i64, scratch_operands = 0 : i64, tpu.core_type = #tpu.core_type<tc>, window_params = [{transform_indices = @transform_0, window_bounds = array<i64: 8, 32>}, {pipeline_mode = #tpu.pipeline_mode<synchronous>, transform_indices = @transform_1, window_bounds = array<i64: 32, 32>}, {pipeline_mode = #tpu.pipeline_mode<synchronous>, transform_indices = @transform_2, window_bounds = array<i64: 1, 32>}, {pipeline_mode = #tpu.pipeline_mode<synchronous>, transform_indices = @transform_3, window_bounds = array<i64: 32, 32>}, {pipeline_mode = #tpu.pipeline_mode<synchronous>, transform_indices = @transform_4, window_bounds = array<i64: 1, 32>}, {pipeline_mode = #tpu.pipeline_mode<synchronous>, transform_indices = @transform_5, window_bounds = array<i64: 32, 4>}, {pipeline_mode = #tpu.pipeline_mode<synchronous>, transform_indices = @transform_6, window_bounds = array<i64: 1, 4>}, {transform_indices = @transform_7, window_bounds = array<i64: 8, 4>}]} {
    %c0 = arith.constant 0 : index
    %c0_0 = arith.constant 0 : index
    %0 = vector.load %arg1[%c0, %c0_0] : memref<8x32xf32, #tpu.memory_space<vmem>>, vector<8x32xf32>
    %c0_1 = arith.constant 0 : index
    %c0_2 = arith.constant 0 : index
    %1 = vector.load %arg2[%c0_1, %c0_2] : memref<32x32xf32, #tpu.memory_space<vmem>>, vector<32x32xf32>
    %c0_3 = arith.constant 0 : index
    %c0_4 = arith.constant 0 : index
    %2 = vector.load %arg3[%c0_3, %c0_4] : memref<1x32xf32, #tpu.memory_space<vmem>>, vector<1x32xf32>
    %cst = arith.constant dense<0.000000e+00> : vector<8x32xf32>
    %3 = tpu.matmul %0, %1, %cst {dimension_numbers = #tpu.dot_dimension_numbers<[1], [0], [0], [1], [0, 0, 1, 1], [], []>, precision = #tpu.contract_precision<fp32>} : vector<8x32xf32>, vector<32x32xf32>, vector<8x32xf32> -> vector<8x32xf32>
    %4 = vector.broadcast %2 : vector<1x32xf32> to vector<8x32xf32>
    %5 = arith.addf %3, %4 : vector<8x32xf32>
    %cst_5 = arith.constant 0.000000e+00 : f32
    %6 = vector.broadcast %cst_5 : f32 to vector<8x32xf32>
    %7 = arith.maximumf %5, %6 : vector<8x32xf32>
    %c0_6 = arith.constant 0 : index
    %c0_7 = arith.constant 0 : index
    %8 = vector.load %arg4[%c0_6, %c0_7] : memref<32x32xf32, #tpu.memory_space<vmem>>, vector<32x32xf32>
    %c0_8 = arith.constant 0 : index
    %c0_9 = arith.constant 0 : index
    %9 = vector.load %arg5[%c0_8, %c0_9] : memref<1x32xf32, #tpu.memory_space<vmem>>, vector<1x32xf32>
    %cst_10 = arith.constant dense<0.000000e+00> : vector<8x32xf32>
    %10 = tpu.matmul %7, %8, %cst_10 {dimension_numbers = #tpu.dot_dimension_numbers<[1], [0], [0], [1], [0, 0, 1, 1], [], []>, precision = #tpu.contract_precision<fp32>} : vector<8x32xf32>, vector<32x32xf32>, vector<8x32xf32> -> vector<8x32xf32>
    %11 = vector.broadcast %9 : vector<1x32xf32> to vector<8x32xf32>
    %12 = arith.addf %10, %11 : vector<8x32xf32>
    %cst_11 = arith.constant 0.000000e+00 : f32
    %13 = vector.broadcast %cst_11 : f32 to vector<8x32xf32>
    %14 = arith.maximumf %12, %13 : vector<8x32xf32>
    %c0_12 = arith.constant 0 : index
    %c0_13 = arith.constant 0 : index
    %15 = vector.load %arg6[%c0_12, %c0_13] : memref<32x4xf32, #tpu.memory_space<vmem>>, vector<32x4xf32>
    %c0_14 = arith.constant 0 : index
    %c0_15 = arith.constant 0 : index
    %16 = vector.load %arg7[%c0_14, %c0_15] : memref<1x4xf32, #tpu.memory_space<vmem>>, vector<1x4xf32>
    %cst_16 = arith.constant dense<0.000000e+00> : vector<8x4xf32>
    %17 = tpu.matmul %14, %15, %cst_16 {dimension_numbers = #tpu.dot_dimension_numbers<[1], [0], [0], [1], [0, 0, 1, 1], [], []>, precision = #tpu.contract_precision<fp32>} : vector<8x32xf32>, vector<32x4xf32>, vector<8x4xf32> -> vector<8x4xf32>
    %18 = vector.broadcast %16 : vector<1x4xf32> to vector<8x4xf32>
    %19 = arith.addf %17, %18 : vector<8x4xf32>
    %20 = arith.negf %19 : vector<8x4xf32>
    %21 = math.exp %20 : vector<8x4xf32>
    %cst_17 = arith.constant 1.000000e+00 : f32
    %22 = vector.broadcast %cst_17 : f32 to vector<8x4xf32>
    %23 = arith.addf %22, %21 : vector<8x4xf32>
    %24 = arith.divf %22, %23 : vector<8x4xf32>
    %c0_18 = arith.constant 0 : index
    %c0_19 = arith.constant 0 : index
    %25 = vector.load %arg8[%c0_18, %c0_19] : memref<8x4xf32, #tpu.memory_space<vmem>>, vector<8x4xf32>
    tpu.vector_store %arg8[%c0_18, %c0_19], %24 {strides = array<i32>} : memref<8x4xf32, #tpu.memory_space<vmem>>, vector<8x4xf32>,
    return
  }
  func.func @transform_0(%arg0: i32) -> (i32, i32) {
    %c0_i32 = arith.constant 0 : i32
    %c0_i32_0 = arith.constant 0 : i32
    return %arg0, %c0_i32 : i32, i32
  }
  func.func @transform_1(%arg0: i32) -> (i32, i32) {
    %c0_i32 = arith.constant 0 : i32
    %c0_i32_0 = arith.constant 0 : i32
    %c0_i32_1 = arith.constant 0 : i32
    return %c0_i32, %c0_i32_0 : i32, i32
  }
  func.func @transform_2(%arg0: i32) -> (i32, i32) {
    %c0_i32 = arith.constant 0 : i32
    %c0_i32_0 = arith.constant 0 : i32
    %c0_i32_1 = arith.constant 0 : i32
    return %c0_i32, %c0_i32_0 : i32, i32
  }
  func.func @transform_3(%arg0: i32) -> (i32, i32) {
    %c0_i32 = arith.constant 0 : i32
    %c0_i32_0 = arith.constant 0 : i32
    %c0_i32_1 = arith.constant 0 : i32
    return %c0_i32, %c0_i32_0 : i32, i32
  }
  func.func @transform_4(%arg0: i32) -> (i32, i32) {
    %c0_i32 = arith.constant 0 : i32
    %c0_i32_0 = arith.constant 0 : i32
    %c0_i32_1 = arith.constant 0 : i32
    return %c0_i32, %c0_i32_0 : i32, i32
  }
  func.func @transform_5(%arg0: i32) -> (i32, i32) {
    %c0_i32 = arith.constant 0 : i32
    %c0_i32_0 = arith.constant 0 : i32
    %c0_i32_1 = arith.constant 0 : i32
    return %c0_i32, %c0_i32_0 : i32, i32
  }
  func.func @transform_6(%arg0: i32) -> (i32, i32) {
    %c0_i32 = arith.constant 0 : i32
    %c0_i32_0 = arith.constant 0 : i32
    %c0_i32_1 = arith.constant 0 : i32
    return %c0_i32, %c0_i32_0 : i32, i32
  }
  func.func @transform_7(%arg0: i32) -> (i32, i32) {
    %c0_i32 = arith.constant 0 : i32
    %c0_i32_0 = arith.constant 0 : i32
    return %arg0, %c0_i32 : i32, i32
  }
}

</mosaic_0001>

<llo_original>
// kernel: tpu_custom_call.1
$region0: #{tpu_custom_call.1}
  #allocation0 [shape = 'u32[]', space=smem, size = 0x4, offset = 0x4, fixed_abs, tag = 'smem constant byte address 0x4 - core index']
  #allocation1 [shape = 'u32[72,128]{1,0:T(1,128)}', space=vmem, size = 0x9000, scoped, tag = 'internal scratch']
  %s0 = inlined_call_operand.hbm [shape: f32[8,32], index: 0, kind: input, shape index: {}]
  %s1 = inlined_call_operand.vmem [shape: f32[32,32], index: 1, kind: input, shape index: {}]
  %s2 = inlined_call_operand.vmem [shape: f32[1,32], index: 2, kind: input, shape index: {}]
  %s3 = inlined_call_operand.hbm [shape: f32[32,32], index: 3, kind: input, shape index: {}]
  %s4 = inlined_call_operand.vmem [shape: f32[1,32], index: 4, kind: input, shape index: {}]
  %s5 = inlined_call_operand.vmem [shape: f32[32,4], index: 5, kind: input, shape index: {}]
  %s6 = inlined_call_operand.vmem [shape: f32[1,4], index: 6, kind: input, shape index: {}]
  %s7 = inlined_call_operand.vmem [shape: f32[8,4], index: 7, kind: output, shape index: {}]
  %s8 = sld [smem:[#allocation0]]
  $region46: #{tpu_custom_call.1} parent=0
    _
  %s10 = ssub.s32 1, %s8
  %s11 = scalar_select 0, %s10, %s8
  $region1: #{tpu_custom_call.1} parent=0
    #allocation2 [shape = 'u8[4096]{0}', space=vmem, size = 0x1000, scoped, tag = 'input window, operand 0, single buffered']
    #allocation3 [shape = 's32[1]{0}', space=sflag, size = 0x4, scoped, tag = 'scoped memory for tpu_custom_call.1']
    #allocation4 [shape = 'u8[16384]{0}', space=vmem, size = 0x4000, scoped, tag = 'input window, operand 3, single buffered']
    #allocation5 [shape = 's32[1]{0}', space=sflag, size = 0x4, scoped, tag = 'scoped memory for tpu_custom_call.1']
    %12 = vsyncpa [#allocation3], 0
    %13 = vsyncpa [#allocation5], 0
    // Predicated region
    $region2: #{tpu_custom_call.1} parent=1 // pred_check
      _
    $region3: #{tpu_custom_call.1} parent=1 // pred_check_branch
      %15 = sbr.rel (0) target = $region5
    $region4: #{tpu_custom_call.1} parent=1 // pred_region
      %17 = vsyncadd [#allocation3], 0
      %s19 = sshll.u32 %s0, 4
      %s20 = int_to_ptr.hbm [resolvable:$true] %s19
      %s21 = sshll.u32 [#allocation2], 4
      %s22 = int_to_ptr.vmem [resolvable:$true] %s21
      %24 = dma.hbm_to_vmem [thread:$0]  %s20, 128, %s22, [#allocation3]
    $region5: #{tpu_custom_call.1} parent=1 // pred_fallthru
      _
    // Predicated region
    $region6: #{tpu_custom_call.1} parent=1 // pred_check
      _
    $region7: #{tpu_custom_call.1} parent=1 // pred_check_branch
      %26 = sbr.rel (0) target = $region9
    $region8: #{tpu_custom_call.1} parent=1 // pred_region
      _
    $region9: #{tpu_custom_call.1} parent=1 // pred_fallthru
      _
    // Predicated region
    $region10: #{tpu_custom_call.1} parent=1 // pred_check
      _
    $region11: #{tpu_custom_call.1} parent=1 // pred_check_branch
      %28 = sbr.rel (0) target = $region13
    $region12: #{tpu_custom_call.1} parent=1 // pred_region
      _
    $region13: #{tpu_custom_call.1} parent=1 // pred_fallthru
      _
    // Predicated region
    $region14: #{tpu_custom_call.1} parent=1 // pred_check
      _
    $region15: #{tpu_custom_call.1} parent=1 // pred_check_branch
      %30 = sbr.rel (0) target = $region17
    $region16: #{tpu_custom_call.1} parent=1 // pred_region
      %32 = vsyncadd [#allocation5], 0
      %s33 = sshll.u32 %s3, 4
      %s34 = int_to_ptr.hbm [resolvable:$true] %s33
      %s35 = sshll.u32 [#allocation4], 4
      %s36 = int_to_ptr.vmem [resolvable:$true] %s35
      %41 = dma.hbm_to_vmem [thread:$0]  %s34, 512, %s36, [#allocation5], 128, 128, 8
    $region17: #{tpu_custom_call.1} parent=1 // pred_fallthru
      _
    // Predicated region
    $region18: #{tpu_custom_call.1} parent=1 // pred_check
      _
    $region19: #{tpu_custom_call.1} parent=1 // pred_check_branch
      %43 = sbr.rel (0) target = $region21
    $region20: #{tpu_custom_call.1} parent=1 // pred_region
      _
    $region21: #{tpu_custom_call.1} parent=1 // pred_fallthru
      _
    // Predicated region
    $region22: #{tpu_custom_call.1} parent=1 // pred_check
      _
    $region23: #{tpu_custom_call.1} parent=1 // pred_check_branch
      %45 = sbr.rel (0) target = $region25
    $region24: #{tpu_custom_call.1} parent=1 // pred_region
      _
    $region25: #{tpu_custom_call.1} parent=1 // pred_fallthru
      _
    // Predicated region
    $region26: #{tpu_custom_call.1} parent=1 // pred_check
      _
    $region27: #{tpu_custom_call.1} parent=1 // pred_check_branch
      %47 = sbr.rel (0) target = $region29
    $region28: #{tpu_custom_call.1} parent=1 // pred_region
      _
    $region29: #{tpu_custom_call.1} parent=1 // pred_fallthru
      _
    // Predicated region
    $region30: #{tpu_custom_call.1} parent=1 // pred_check
      _
    $region31: #{tpu_custom_call.1} parent=1 // pred_check_branch
      %49 = sbr.rel (0) target = $region33
    $region32: #{tpu_custom_call.1} parent=1 // pred_region
      %51 = dma.done [#allocation3], 128
    $region33: #{tpu_custom_call.1} parent=1 // pred_fallthru
      _
    // Predicated region
    $region34: #{tpu_custom_call.1} parent=1 // pred_check
      _
    $region35: #{tpu_custom_call.1} parent=1 // pred_check_branch
      %53 = sbr.rel (0) target = $region37
    $region36: #{tpu_custom_call.1} parent=1 // pred_region
      %55 = dma.done [#allocation5], 512
    $region37: #{tpu_custom_call.1} parent=1 // pred_fallthru
      _
    %v56 = vld [vmem:[#allocation2] sm:$0xff]
    %v57 = vld [vmem:[%s1] sm:$0xff]
    %v58 = vld [vmem:[%s1 + $0x8] sm:$0xff]
    %v59 = vld [vmem:[%s1 + $0x10] sm:$0xff]
    %v60 = vld [vmem:[%s1 + $0x18] sm:$0xff]
    %v61 = vld [vmem:[%s2] sm:$0x1]
    %v63 = vperm.slane %v61, 0
    %vm65 = vcmask 261120
    %v67 = vsel %vm65, %v56, 0
    %69 = vmatpush.msra.mxu0 0.0
    %70 = vmatpush.msra.mxu0 0.0
    %71 = vmatpush.msra.mxu0 0.0
    %72 = vmatpush.msra.mxu0 0.0
    %73 = vmatpush.msra.mxu0 0.0
    %74 = vmatpush.msra.mxu0 0.0
    %75 = vmatpush.msra.mxu0 0.0
    %76 = vmatpush.msra.mxu0 0.0
    %77 = vmatpush.msra.mxu0 0.0
    %78 = vmatpush.msra.mxu0 0.0
    %79 = vmatpush.msra.mxu0 0.0
    %80 = vmatpush.msra.mxu0 0.0
    %v81 = vand.u32 %v60, 4294901760
    %82 = vmatpush.msra.mxu0 %v81
    %v83 = vand.u32 %v59, 4294901760
    %84 = vmatpush.msra.mxu0 %v83
    %v85 = vand.u32 %v58, 4294901760
    %86 = vmatpush.msra.mxu0 %v85
    %v87 = vand.u32 %v57, 4294901760
    %88 = vmatpush.msra.mxu0 %v87
    %v89 = vand.u32 %v67, 4294901760
    %v90 = vsub.f32 %v67, %v89
    %v91 = vand.u32 %v90, 4294901760
    %v92 = vsub.f32 %v90, %v91
    %v93 = vand.u32 %v92, 4294901760
    %94 = vmatmul.f32.gmra.mxu0 %v93
    %v95 = vpop.f32.mrf.mxu0
    %v96 = vadd.f32 %v63, %v95
    %97 = vdwg.mxu0
    %98 = vmatpush.msra.mxu0 0.0
    %99 = vmatpush.msra.mxu0 0.0
    %100 = vmatpush.msra.mxu0 0.0
    %101 = vmatpush.msra.mxu0 0.0
    %102 = vmatpush.msra.mxu0 0.0
    %103 = vmatpush.msra.mxu0 0.0
    %104 = vmatpush.msra.mxu0 0.0
    %105 = vmatpush.msra.mxu0 0.0
    %106 = vmatpush.msra.mxu0 0.0
    %107 = vmatpush.msra.mxu0 0.0
    %108 = vmatpush.msra.mxu0 0.0
    %109 = vmatpush.msra.mxu0 0.0
    %v110 = vand.u32 %v60, 4294901760
    %v111 = vsub.f32 %v60, %v110
    %v112 = vand.u32 %v111, 4294901760
    %v113 = vsub.f32 %v111, %v112
    %v114 = vand.u32 %v113, 4294901760
    %115 = vmatpush.msra.mxu0 %v114
    %v116 = vand.u32 %v59, 4294901760
    %v117 = vsub.f32 %v59, %v116
    %v118 = vand.u32 %v117, 4294901760
    %v119 = vsub.f32 %v117, %v118
    %v120 = vand.u32 %v119, 4294901760
    %121 = vmatpush.msra.mxu0 %v120
    %v122 = vand.u32 %v58, 4294901760
    %v123 = vsub.f32 %v58, %v122
    %v124 = vand.u32 %v123, 4294901760
    %v125 = vsub.f32 %v123, %v124
    %v126 = vand.u32 %v125, 4294901760
    %127 = vmatpush.msra.mxu0 %v126
    %v128 = vand.u32 %v57, 4294901760
    %v129 = vsub.f32 %v57, %v128
    %v130 = vand.u32 %v129, 4294901760
    %v131 = vsub.f32 %v129, %v130
    %v132 = vand.u32 %v131, 4294901760
    %133 = vmatpush.msra.mxu0 %v132
    %v134 = vand.u32 %v67, 4294901760
    %135 = vmatmul.f32.gmra.mxu0 %v134
    %v136 = vpop.f32.mrf.mxu0
    %v137 = vadd.f32 %v96, %v136
    %138 = vdwg.mxu0
    %139 = vmatpush.msra.mxu0 0.0
    %140 = vmatpush.msra.mxu0 0.0
    %141 = vmatpush.msra.mxu0 0.0
    %142 = vmatpush.msra.mxu0 0.0
    %143 = vmatpush.msra.mxu0 0.0
    %144 = vmatpush.msra.mxu0 0.0
    %145 = vmatpush.msra.mxu0 0.0
    %146 = vmatpush.msra.mxu0 0.0
    %147 = vmatpush.msra.mxu0 0.0
    %148 = vmatpush.msra.mxu0 0.0
    %149 = vmatpush.msra.mxu0 0.0
    %150 = vmatpush.msra.mxu0 0.0
    %v151 = vand.u32 %v60, 4294901760
    %v152 = vsub.f32 %v60, %v151
    %153 = vmatpush.msra.mxu0 %v152
    %v154 = vand.u32 %v59, 4294901760
    %v155 = vsub.f32 %v59, %v154
    %156 = vmatpush.msra.mxu0 %v155
    %v157 = vand.u32 %v58, 4294901760
    %v158 = vsub.f32 %v58, %v157
    %159 = vmatpush.msra.mxu0 %v158
    %v160 = vand.u32 %v57, 4294901760
    %v161 = vsub.f32 %v57, %v160
    %162 = vmatpush.msra.mxu0 %v161
    %v163 = vand.u32 %v67, 4294901760
    %v164 = vsub.f32 %v67, %v163
    %165 = vmatmul.f32.gmra.mxu0 %v164
    %v166 = vpop.f32.mrf.mxu0
    %v167 = vadd.f32 %v137, %v166
    %168 = vdwg.mxu0
    %169 = vmatpush.msra.mxu0 0.0
    %170 = vmatpush.msra.mxu0 0.0
    %171 = vmatpush.msra.mxu0 0.0
    %172 = vmatpush.msra.mxu0 0.0
    %173 = vmatpush.msra.mxu0 0.0
    %174 = vmatpush.msra.mxu0 0.0
    %175 = vmatpush.msra.mxu0 0.0
    %176 = vmatpush.msra.mxu0 0.0
    %177 = vmatpush.msra.mxu0 0.0
    %178 = vmatpush.msra.mxu0 0.0
    %179 = vmatpush.msra.mxu0 0.0
    %180 = vmatpush.msra.mxu0 0.0
    %v181 = vand.u32 %v60, 4294901760
    %182 = vmatpush.msra.mxu0 %v181
    %v183 = vand.u32 %v59, 4294901760
    %184 = vmatpush.msra.mxu0 %v183
    %v185 = vand.u32 %v58, 4294901760
    %186 = vmatpush.msra.mxu0 %v185
    %v187 = vand.u32 %v57, 4294901760
    %188 = vmatpush.msra.mxu0 %v187
    %v189 = vand.u32 %v67, 4294901760
    %v190 = vsub.f32 %v67, %v189
    %v191 = vand.u32 %v190, 4294901760
    %192 = vmatmul.f32.gmra.mxu0 %v191
    %v193 = vpop.f32.mrf.mxu0
    %v194 = vadd.f32 %v167, %v193
    %195 = vdwg.mxu0
    %196 = vmatpush.msra.mxu0 0.0
    %197 = vmatpush.msra.mxu0 0.0
    %198 = vmatpush.msra.mxu0 0.0
    %199 = vmatpush.msra.mxu0 0.0
    %200 = vmatpush.msra.mxu0 0.0
    %201 = vmatpush.msra.mxu0 0.0
    %202 = vmatpush.msra.mxu0 0.0
    %203 = vmatpush.msra.mxu0 0.0
    %204 = vmatpush.msra.mxu0 0.0
    %205 = vmatpush.msra.mxu0 0.0
    %206 = vmatpush.msra.mxu0 0.0
    %207 = vmatpush.msra.mxu0 0.0
    %v208 = vand.u32 %v60, 4294901760
    %v209 = vsub.f32 %v60, %v208
    %v210 = vand.u32 %v209, 4294901760
    %211 = vmatpush.msra.mxu0 %v210
    %v212 = vand.u32 %v59, 4294901760
    %v213 = vsub.f32 %v59, %v212
    %v214 = vand.u32 %v213, 4294901760
    %215 = vmatpush.msra.mxu0 %v214
    %v216 = vand.u32 %v58, 4294901760
    %v217 = vsub.f32 %v58, %v216
    %v218 = vand.u32 %v217, 4294901760
    %219 = vmatpush.msra.mxu0 %v218
    %v220 = vand.u32 %v57, 4294901760
    %v221 = vsub.f32 %v57, %v220
    %v222 = vand.u32 %v221, 4294901760
    %223 = vmatpush.msra.mxu0 %v222
    %v224 = vand.u32 %v67, 4294901760
    %225 = vmatmul.f32.gmra.mxu0 %v224
    %v226 = vpop.f32.mrf.mxu0
    %v227 = vadd.f32 %v194, %v226
    %228 = vdwg.mxu0
    %229 = vmatpush.msra.mxu0 0.0
    %230 = vmatpush.msra.mxu0 0.0
    %231 = vmatpush.msra.mxu0 0.0
    %232 = vmatpush.msra.mxu0 0.0
    %233 = vmatpush.msra.mxu0 0.0
    %234 = vmatpush.msra.mxu0 0.0
    %235 = vmatpush.msra.mxu0 0.0
    %236 = vmatpush.msra.mxu0 0.0
    %237 = vmatpush.msra.mxu0 0.0
    %238 = vmatpush.msra.mxu0 0.0
    %239 = vmatpush.msra.mxu0 0.0
    %240 = vmatpush.msra.mxu0 0.0
    %v241 = vand.u32 %v60, 4294901760
    %242 = vmatpush.msra.mxu0 %v241
    %v243 = vand.u32 %v59, 4294901760
    %244 = vmatpush.msra.mxu0 %v243
    %v245 = vand.u32 %v58, 4294901760
    %246 = vmatpush.msra.mxu0 %v245
    %v247 = vand.u32 %v57, 4294901760
    %248 = vmatpush.msra.mxu0 %v247
    %v249 = vand.u32 %v67, 4294901760
    %250 = vmatmul.f32.gmra.mxu0 %v249
    %v251 = vpop.f32.mrf.mxu0
    %v252 = vadd.f32 %v227, %v251
    %253 = vdwg.mxu0
    %v254 = vmax.f32 %v252, 0.0
    %v255 = vld [vmem:[#allocation4] sm:$0xff]
    %v256 = vld [vmem:[#allocation4 + $0x8] sm:$0xff]
    %v257 = vld [vmem:[#allocation4 + $0x10] sm:$0xff]
    %v258 = vld [vmem:[#allocation4 + $0x18] sm:$0xff]
    %v259 = vld [vmem:[%s4] sm:$0x1]
    %v261 = vperm.slane %v259, 0
    %v264 = vsel %vm65, %v254, 0
    %266 = vmatpush.msra.mxu0 0.0
    %267 = vmatpush.msra.mxu0 0.0
    %268 = vmatpush.msra.mxu0 0.0
    %269 = vmatpush.msra.mxu0 0.0
    %270 = vmatpush.msra.mxu0 0.0
    %271 = vmatpush.msra.mxu0 0.0
    %272 = vmatpush.msra.mxu0 0.0
    %273 = vmatpush.msra.mxu0 0.0
    %274 = vmatpush.msra.mxu0 0.0
    %275 = vmatpush.msra.mxu0 0.0
    %276 = vmatpush.msra.mxu0 0.0
    %277 = vmatpush.msra.mxu0 0.0
    %v278 = vand.u32 %v258, 4294901760
    %279 = vmatpush.msra.mxu0 %v278
    %v280 = vand.u32 %v257, 4294901760
    %281 = vmatpush.msra.mxu0 %v280
    %v282 = vand.u32 %v256, 4294901760
    %283 = vmatpush.msra.mxu0 %v282
    %v284 = vand.u32 %v255, 4294901760
    %285 = vmatpush.msra.mxu0 %v284
    %v286 = vand.u32 %v264, 4294901760
    %v287 = vsub.f32 %v264, %v286
    %v288 = vand.u32 %v287, 4294901760
    %v289 = vsub.f32 %v287, %v288
    %v290 = vand.u32 %v289, 4294901760
    %291 = vmatmul.f32.gmra.mxu0 %v290
    %v292 = vpop.f32.mrf.mxu0
    %v293 = vadd.f32 %v261, %v292
    %294 = vdwg.mxu0
    %295 = vmatpush.msra.mxu0 0.0
    %296 = vmatpush.msra.mxu0 0.0
    %297 = vmatpush.msra.mxu0 0.0
    %298 = vmatpush.msra.mxu0 0.0
    %299 = vmatpush.msra.mxu0 0.0
    %300 = vmatpush.msra.mxu0 0.0
    %301 = vmatpush.msra.mxu0 0.0
    %302 = vmatpush.msra.mxu0 0.0
    %303 = vmatpush.msra.mxu0 0.0
    %304 = vmatpush.msra.mxu0 0.0
    %305 = vmatpush.msra.mxu0 0.0
    %306 = vmatpush.msra.mxu0 0.0
    %v307 = vand.u32 %v258, 4294901760
    %v308 = vsub.f32 %v258, %v307
    %v309 = vand.u32 %v308, 4294901760
    %v310 = vsub.f32 %v308, %v309
    %v311 = vand.u32 %v310, 4294901760
    %312 = vmatpush.msra.mxu0 %v311
    %v313 = vand.u32 %v257, 4294901760
    %v314 = vsub.f32 %v257, %v313
    %v315 = vand.u32 %v314, 4294901760
    %v316 = vsub.f32 %v314, %v315
    %v317 = vand.u32 %v316, 4294901760
    %318 = vmatpush.msra.mxu0 %v317
    %v319 = vand.u32 %v256, 4294901760
    %v320 = vsub.f32 %v256, %v319
    %v321 = vand.u32 %v320, 4294901760
    %v322 = vsub.f32 %v320, %v321
    %v323 = vand.u32 %v322, 4294901760
    %324 = vmatpush.msra.mxu0 %v323
    %v325 = vand.u32 %v255, 4294901760
    %v326 = vsub.f32 %v255, %v325
    %v327 = vand.u32 %v326, 4294901760
    %v328 = vsub.f32 %v326, %v327
    %v329 = vand.u32 %v328, 4294901760
    %330 = vmatpush.msra.mxu0 %v329
    %v331 = vand.u32 %v264, 4294901760
    %332 = vmatmul.f32.gmra.mxu0 %v331
    %v333 = vpop.f32.mrf.mxu0
    %v334 = vadd.f32 %v293, %v333
    %335 = vdwg.mxu0
    %336 = vmatpush.msra.mxu0 0.0
    %337 = vmatpush.msra.mxu0 0.0
    %338 = vmatpush.msra.mxu0 0.0
    %339 = vmatpush.msra.mxu0 0.0
    %340 = vmatpush.msra.mxu0 0.0
    %341 = vmatpush.msra.mxu0 0.0
    %342 = vmatpush.msra.mxu0 0.0
    %343 = vmatpush.msra.mxu0 0.0
    %344 = vmatpush.msra.mxu0 0.0
    %345 = vmatpush.msra.mxu0 0.0
    %346 = vmatpush.msra.mxu0 0.0
    %347 = vmatpush.msra.mxu0 0.0
    %v348 = vand.u32 %v258, 4294901760
    %v349 = vsub.f32 %v258, %v348
    %350 = vmatpush.msra.mxu0 %v349
    %v351 = vand.u32 %v257, 4294901760
    %v352 = vsub.f32 %v257, %v351
    %353 = vmatpush.msra.mxu0 %v352
    %v354 = vand.u32 %v256, 4294901760
    %v355 = vsub.f32 %v256, %v354
    %356 = vmatpush.msra.mxu0 %v355
    %v357 = vand.u32 %v255, 4294901760
    %v358 = vsub.f32 %v255, %v357
    %359 = vmatpush.msra.mxu0 %v358
    %v360 = vand.u32 %v264, 4294901760
    %v361 = vsub.f32 %v264, %v360
    %362 = vmatmul.f32.gmra.mxu0 %v361
    %v363 = vpop.f32.mrf.mxu0
    %v364 = vadd.f32 %v334, %v363
    %365 = vdwg.mxu0
    %366 = vmatpush.msra.mxu0 0.0
    %367 = vmatpush.msra.mxu0 0.0
    %368 = vmatpush.msra.mxu0 0.0
    %369 = vmatpush.msra.mxu0 0.0
    %370 = vmatpush.msra.mxu0 0.0
    %371 = vmatpush.msra.mxu0 0.0
    %372 = vmatpush.msra.mxu0 0.0
    %373 = vmatpush.msra.mxu0 0.0
    %374 = vmatpush.msra.mxu0 0.0
    %375 = vmatpush.msra.mxu0 0.0
    %376 = vmatpush.msra.mxu0 0.0
    %377 = vmatpush.msra.mxu0 0.0
    %v378 = vand.u32 %v258, 4294901760
    %379 = vmatpush.msra.mxu0 %v378
    %v380 = vand.u32 %v257, 4294901760
    %381 = vmatpush.msra.mxu0 %v380
    %v382 = vand.u32 %v256, 4294901760
    %383 = vmatpush.msra.mxu0 %v382
    %v384 = vand.u32 %v255, 4294901760
    %385 = vmatpush.msra.mxu0 %v384
    %v386 = vand.u32 %v264, 4294901760
    %v387 = vsub.f32 %v264, %v386
    %v388 = vand.u32 %v387, 4294901760
    %389 = vmatmul.f32.gmra.mxu0 %v388
    %v390 = vpop.f32.mrf.mxu0
    %v391 = vadd.f32 %v364, %v390
    %392 = vdwg.mxu0
    %393 = vmatpush.msra.mxu0 0.0
    %394 = vmatpush.msra.mxu0 0.0
    %395 = vmatpush.msra.mxu0 0.0
    %396 = vmatpush.msra.mxu0 0.0
    %397 = vmatpush.msra.mxu0 0.0
    %398 = vmatpush.msra.mxu0 0.0
    %399 = vmatpush.msra.mxu0 0.0
    %400 = vmatpush.msra.mxu0 0.0
    %401 = vmatpush.msra.mxu0 0.0
    %402 = vmatpush.msra.mxu0 0.0
    %403 = vmatpush.msra.mxu0 0.0
    %404 = vmatpush.msra.mxu0 0.0
    %v405 = vand.u32 %v258, 4294901760
    %v406 = vsub.f32 %v258, %v405
    %v407 = vand.u32 %v406, 4294901760
    %408 = vmatpush.msra.mxu0 %v407
    %v409 = vand.u32 %v257, 4294901760
    %v410 = vsub.f32 %v257, %v409
    %v411 = vand.u32 %v410, 4294901760
    %412 = vmatpush.msra.mxu0 %v411
    %v413 = vand.u32 %v256, 4294901760
    %v414 = vsub.f32 %v256, %v413
    %v415 = vand.u32 %v414, 4294901760
    %416 = vmatpush.msra.mxu0 %v415
    %v417 = vand.u32 %v255, 4294901760
    %v418 = vsub.f32 %v255, %v417
    %v419 = vand.u32 %v418, 4294901760
    %420 = vmatpush.msra.mxu0 %v419
    %v421 = vand.u32 %v264, 4294901760
    %422 = vmatmul.f32.gmra.mxu0 %v421
    %v423 = vpop.f32.mrf.mxu0
    %v424 = vadd.f32 %v391, %v423
    %425 = vdwg.mxu0
    %426 = vmatpush.msra.mxu0 0.0
    %427 = vmatpush.msra.mxu0 0.0
    %428 = vmatpush.msra.mxu0 0.0
    %429 = vmatpush.msra.mxu0 0.0
    %430 = vmatpush.msra.mxu0 0.0
    %431 = vmatpush.msra.mxu0 0.0
    %432 = vmatpush.msra.mxu0 0.0
    %433 = vmatpush.msra.mxu0 0.0
    %434 = vmatpush.msra.mxu0 0.0
    %435 = vmatpush.msra.mxu0 0.0
    %436 = vmatpush.msra.mxu0 0.0
    %437 = vmatpush.msra.mxu0 0.0
    %v438 = vand.u32 %v258, 4294901760
    %439 = vmatpush.msra.mxu0 %v438
    %v440 = vand.u32 %v257, 4294901760
    %441 = vmatpush.msra.mxu0 %v440
    %v442 = vand.u32 %v256, 4294901760
    %443 = vmatpush.msra.mxu0 %v442
    %v444 = vand.u32 %v255, 4294901760
    %445 = vmatpush.msra.mxu0 %v444
    %v446 = vand.u32 %v264, 4294901760
    %447 = vmatmul.f32.gmra.mxu0 %v446
    %v448 = vpop.f32.mrf.mxu0
    %v449 = vadd.f32 %v424, %v448
    %450 = vdwg.mxu0
    %v451 = vmax.f32 %v449, 0.0
    %v452 = vld [vmem:[%s5] sm:$0xff]
    %v453 = vld [vmem:[%s5 + $0x8] sm:$0xff]
    %v454 = vld [vmem:[%s5 + $0x10] sm:$0xff]
    %v455 = vld [vmem:[%s5 + $0x18] sm:$0xff]
    %v456 = vld [vmem:[%s6] sm:$0x1]
    %v458 = vperm.slane %v456, 0
    %v461 = vsel %vm65, %v451, 0
    %463 = vmatpush.msra.mxu0 0.0
    %464 = vmatpush.msra.mxu0 0.0
    %465 = vmatpush.msra.mxu0 0.0
    %466 = vmatpush.msra.mxu0 0.0
    %467 = vmatpush.msra.mxu0 0.0
    %468 = vmatpush.msra.mxu0 0.0
    %469 = vmatpush.msra.mxu0 0.0
    %470 = vmatpush.msra.mxu0 0.0
    %471 = vmatpush.msra.mxu0 0.0
    %472 = vmatpush.msra.mxu0 0.0
    %473 = vmatpush.msra.mxu0 0.0
    %474 = vmatpush.msra.mxu0 0.0
    %v475 = vand.u32 %v455, 4294901760
    %476 = vmatpush.msra.mxu0 %v475
    %v477 = vand.u32 %v454, 4294901760
    %478 = vmatpush.msra.mxu0 %v477
    %v479 = vand.u32 %v453, 4294901760
    %480 = vmatpush.msra.mxu0 %v479
    %v481 = vand.u32 %v452, 4294901760
    %482 = vmatpush.msra.mxu0 %v481
    %v483 = vand.u32 %v461, 4294901760
    %v484 = vsub.f32 %v461, %v483
    %v485 = vand.u32 %v484, 4294901760
    %v486 = vsub.f32 %v484, %v485
    %v487 = vand.u32 %v486, 4294901760
    %488 = vmatmul.f32.gmra.mxu0 %v487
    %v489 = vpop.f32.mrf.mxu0
    %v490 = vadd.f32 %v458, %v489
    %491 = vdwg.mxu0
    %492 = vmatpush.msra.mxu0 0.0
    %493 = vmatpush.msra.mxu0 0.0
    %494 = vmatpush.msra.mxu0 0.0
    %495 = vmatpush.msra.mxu0 0.0
    %496 = vmatpush.msra.mxu0 0.0
    %497 = vmatpush.msra.mxu0 0.0
    %498 = vmatpush.msra.mxu0 0.0
    %499 = vmatpush.msra.mxu0 0.0
    %500 = vmatpush.msra.mxu0 0.0
    %501 = vmatpush.msra.mxu0 0.0
    %502 = vmatpush.msra.mxu0 0.0
    %503 = vmatpush.msra.mxu0 0.0
    %v504 = vand.u32 %v455, 4294901760
    %v505 = vsub.f32 %v455, %v504
    %v506 = vand.u32 %v505, 4294901760
    %v507 = vsub.f32 %v505, %v506
    %v508 = vand.u32 %v507, 4294901760
    %509 = vmatpush.msra.mxu0 %v508
    %v510 = vand.u32 %v454, 4294901760
    %v511 = vsub.f32 %v454, %v510
    %v512 = vand.u32 %v511, 4294901760
    %v513 = vsub.f32 %v511, %v512
    %v514 = vand.u32 %v513, 4294901760
    %515 = vmatpush.msra.mxu0 %v514
    %v516 = vand.u32 %v453, 4294901760
    %v517 = vsub.f32 %v453, %v516
    %v518 = vand.u32 %v517, 4294901760
    %v519 = vsub.f32 %v517, %v518
    %v520 = vand.u32 %v519, 4294901760
    %521 = vmatpush.msra.mxu0 %v520
    %v522 = vand.u32 %v452, 4294901760
    %v523 = vsub.f32 %v452, %v522
    %v524 = vand.u32 %v523, 4294901760
    %v525 = vsub.f32 %v523, %v524
    %v526 = vand.u32 %v525, 4294901760
    %527 = vmatpush.msra.mxu0 %v526
    %v528 = vand.u32 %v461, 4294901760
    %529 = vmatmul.f32.gmra.mxu0 %v528
    %v530 = vpop.f32.mrf.mxu0
    %v531 = vadd.f32 %v490, %v530
    %532 = vdwg.mxu0
    %533 = vmatpush.msra.mxu0 0.0
    %534 = vmatpush.msra.mxu0 0.0
    %535 = vmatpush.msra.mxu0 0.0
    %536 = vmatpush.msra.mxu0 0.0
    %537 = vmatpush.msra.mxu0 0.0
    %538 = vmatpush.msra.mxu0 0.0
    %539 = vmatpush.msra.mxu0 0.0
    %540 = vmatpush.msra.mxu0 0.0
    %541 = vmatpush.msra.mxu0 0.0
    %542 = vmatpush.msra.mxu0 0.0
    %543 = vmatpush.msra.mxu0 0.0
    %544 = vmatpush.msra.mxu0 0.0
    %v545 = vand.u32 %v455, 4294901760
    %v546 = vsub.f32 %v455, %v545
    %547 = vmatpush.msra.mxu0 %v546
    %v548 = vand.u32 %v454, 4294901760
    %v549 = vsub.f32 %v454, %v548
    %550 = vmatpush.msra.mxu0 %v549
    %v551 = vand.u32 %v453, 4294901760
    %v552 = vsub.f32 %v453, %v551
    %553 = vmatpush.msra.mxu0 %v552
    %v554 = vand.u32 %v452, 4294901760
    %v555 = vsub.f32 %v452, %v554
    %556 = vmatpush.msra.mxu0 %v555
    %v557 = vand.u32 %v461, 4294901760
    %v558 = vsub.f32 %v461, %v557
    %559 = vmatmul.f32.gmra.mxu0 %v558
    %v560 = vpop.f32.mrf.mxu0
    %v561 = vadd.f32 %v531, %v560
    %562 = vdwg.mxu0
    %563 = vmatpush.msra.mxu0 0.0
    %564 = vmatpush.msra.mxu0 0.0
    %565 = vmatpush.msra.mxu0 0.0
    %566 = vmatpush.msra.mxu0 0.0
    %567 = vmatpush.msra.mxu0 0.0
    %568 = vmatpush.msra.mxu0 0.0
    %569 = vmatpush.msra.mxu0 0.0
    %570 = vmatpush.msra.mxu0 0.0
    %571 = vmatpush.msra.mxu0 0.0
    %572 = vmatpush.msra.mxu0 0.0
    %573 = vmatpush.msra.mxu0 0.0
    %574 = vmatpush.msra.mxu0 0.0
    %v575 = vand.u32 %v455, 4294901760
    %576 = vmatpush.msra.mxu0 %v575
    %v577 = vand.u32 %v454, 4294901760
    %578 = vmatpush.msra.mxu0 %v577
    %v579 = vand.u32 %v453, 4294901760
    %580 = vmatpush.msra.mxu0 %v579
    %v581 = vand.u32 %v452, 4294901760
    %582 = vmatpush.msra.mxu0 %v581
    %v583 = vand.u32 %v461, 4294901760
    %v584 = vsub.f32 %v461, %v583
    %v585 = vand.u32 %v584, 4294901760
    %586 = vmatmul.f32.gmra.mxu0 %v585
    %v587 = vpop.f32.mrf.mxu0
    %v588 = vadd.f32 %v561, %v587
    %589 = vdwg.mxu0
    %590 = vmatpush.msra.mxu0 0.0
    %591 = vmatpush.msra.mxu0 0.0
    %592 = vmatpush.msra.mxu0 0.0
    %593 = vmatpush.msra.mxu0 0.0
    %594 = vmatpush.msra.mxu0 0.0
    %595 = vmatpush.msra.mxu0 0.0
    %596 = vmatpush.msra.mxu0 0.0
    %597 = vmatpush.msra.mxu0 0.0
    %598 = vmatpush.msra.mxu0 0.0
    %599 = vmatpush.msra.mxu0 0.0
    %600 = vmatpush.msra.mxu0 0.0
    %601 = vmatpush.msra.mxu0 0.0
    %v602 = vand.u32 %v455, 4294901760
    %v603 = vsub.f32 %v455, %v602
    %v604 = vand.u32 %v603, 4294901760
    %605 = vmatpush.msra.mxu0 %v604
    %v606 = vand.u32 %v454, 4294901760
    %v607 = vsub.f32 %v454, %v606
    %v608 = vand.u32 %v607, 4294901760
    %609 = vmatpush.msra.mxu0 %v608
    %v610 = vand.u32 %v453, 4294901760
    %v611 = vsub.f32 %v453, %v610
    %v612 = vand.u32 %v611, 4294901760
    %613 = vmatpush.msra.mxu0 %v612
    %v614 = vand.u32 %v452, 4294901760
    %v615 = vsub.f32 %v452, %v614
    %v616 = vand.u32 %v615, 4294901760
    %617 = vmatpush.msra.mxu0 %v616
    %v618 = vand.u32 %v461, 4294901760
    %619 = vmatmul.f32.gmra.mxu0 %v618
    %v620 = vpop.f32.mrf.mxu0
    %v621 = vadd.f32 %v588, %v620
    %622 = vdwg.mxu0
    %623 = vmatpush.msra.mxu0 0.0
    %624 = vmatpush.msra.mxu0 0.0
    %625 = vmatpush.msra.mxu0 0.0
    %626 = vmatpush.msra.mxu0 0.0
    %627 = vmatpush.msra.mxu0 0.0
    %628 = vmatpush.msra.mxu0 0.0
    %629 = vmatpush.msra.mxu0 0.0
    %630 = vmatpush.msra.mxu0 0.0
    %631 = vmatpush.msra.mxu0 0.0
    %632 = vmatpush.msra.mxu0 0.0
    %633 = vmatpush.msra.mxu0 0.0
    %634 = vmatpush.msra.mxu0 0.0
    %v635 = vand.u32 %v455, 4294901760
    %636 = vmatpush.msra.mxu0 %v635
    %v637 = vand.u32 %v454, 4294901760
    %638 = vmatpush.msra.mxu0 %v637
    %v639 = vand.u32 %v453, 4294901760
    %640 = vmatpush.msra.mxu0 %v639
    %v641 = vand.u32 %v452, 4294901760
    %642 = vmatpush.msra.mxu0 %v641
    %v643 = vand.u32 %v461, 4294901760
    %644 = vmatmul.f32.gmra.mxu0 %v643
    %v645 = vpop.f32.mrf.mxu0
    %v646 = vadd.f32 %v621, %v645
    %647 = vdwg.mxu0
    %v648 = vxor.u32 %v646, 2147483648
    %v649 = vmul.f32 %v648, 1.442695
    %v650 = vpow.pop %v649
    %v651 = vadd.f32 %v650, 1.0
    %v652 = vrcp.pop %v651
    %v653 = vmul.f32 %v651, %v652
    %v654 = vsub.f32 1.0, %v653
    %v655 = vmul.f32 %v652, %v654
    %v656 = vadd.f32 %v652, %v655
    %vm657 = vweird.f32 %v651
    %vm658 = vweird.f32 %v652
    %vm659 = vmor %vm657, %vm658
    %v660 = vsel %vm659, %v652, %v656
    %v661 = vand.u32 2147483647, %v651
    %vm662 = vcmp.eq.f32.partialorder %v661, 8.507059e+37
    %v663 = vand.u32 %v651, 2147483648
    %v664 = vor.u32 1.1754944e-38, %v663
    %v665 = vsel %vm662, %v664, %v660
    %v666 = vmul.f32 1.0, %v665
    %vm667 = vcmask 31744
    %668 = vst.msk [vmem:[%s7] sm:$0xff] %vm667, %v666
    // Predicated region
    $region38: #{tpu_custom_call.1} parent=1 // pred_check
      _
    $region39: #{tpu_custom_call.1} parent=1 // pred_check_branch
      %670 = sbr.rel (0) target = $region41
    $region40: #{tpu_custom_call.1} parent=1 // pred_region
      _
    $region41: #{tpu_custom_call.1} parent=1 // pred_fallthru
      _
    // Predicated region
    $region42: #{tpu_custom_call.1} parent=1 // pred_check
      _
    $region43: #{tpu_custom_call.1} parent=1 // pred_check_branch
      %672 = sbr.rel (0) target = $region45
    $region44: #{tpu_custom_call.1} parent=1 // pred_region
      _
    $region45: #{tpu_custom_call.1} parent=1 // pred_fallthru
      _
    %673 = vsyncpa [#allocation3], 1
    %674 = vsyncpa [#allocation5], 1

// kernel: tpu_custom_call.1
$region0: #{tpu_custom_call.1}
  #allocation0 [shape = 'u32[]', space=smem, size = 0x4, offset = 0x4, fixed_abs, tag = 'smem constant byte address 0x4 - core index']
  #allocation1 [shape = 'u32[72,128]{1,0:T(1,128)}', space=vmem, size = 0x9000, scoped, tag = 'internal scratch']
  %s0 = inlined_call_operand.hbm [shape: f32[8,32], index: 0, kind: input, shape index: {}]
  %s1 = inlined_call_operand.vmem [shape: f32[32,32], index: 1, kind: input, shape index: {}]
  %s2 = inlined_call_operand.vmem [shape: f32[1,32], index: 2, kind: input, shape index: {}]
  %s3 = inlined_call_operand.hbm [shape: f32[32,32], index: 3, kind: input, shape index: {}]
  %s4 = inlined_call_operand.vmem [shape: f32[1,32], index: 4, kind: input, shape index: {}]
  %s5 = inlined_call_operand.vmem [shape: f32[32,4], index: 5, kind: input, shape index: {}]
  %s6 = inlined_call_operand.vmem [shape: f32[1,4], index: 6, kind: input, shape index: {}]
  %s7 = inlined_call_operand.vmem [shape: f32[8,4], index: 7, kind: output, shape index: {}]
  %s8 = sld [smem:[#allocation0]]
  $region46: #{tpu_custom_call.1} parent=0
    _
  %s10 = ssub.s32 1, %s8
  %s11 = scalar_select 0, %s10, %s8
  $region1: #{tpu_custom_call.1} parent=0
    #allocation2 [shape = 'u8[4096]{0}', space=vmem, size = 0x1000, scoped, tag = 'input window, operand 0, single buffered']
    #allocation3 [shape = 's32[1]{0}', space=sflag, size = 0x4, scoped, tag = 'scoped memory for tpu_custom_call.1']
    #allocation4 [shape = 'u8[16384]{0}', space=vmem, size = 0x4000, scoped, tag = 'input window, operand 3, single buffered']
    #allocation5 [shape = 's32[1]{0}', space=sflag, size = 0x4, scoped, tag = 'scoped memory for tpu_custom_call.1']
    %12 = vsyncpa [#allocation3], 0
    %13 = vsyncpa [#allocation5], 0
    // Predicated region
    $region2: #{tpu_custom_call.1} parent=1 // pred_check
      _
    $region3: #{tpu_custom_call.1} parent=1 // pred_check_branch
      %15 = sbr.rel (0) target = $region5
    $region4: #{tpu_custom_call.1} parent=1 // pred_region
      %17 = vsyncadd [#allocation3], 0
      %s19 = sshll.u32 %s0, 4
      %s20 = int_to_ptr.hbm [resolvable:$true] %s19
      %s21 = sshll.u32 [#allocation2], 4
      %s22 = int_to_ptr.vmem [resolvable:$true] %s21
      %24 = dma.hbm_to_vmem [thread:$0]  %s20, 128, %s22, [#allocation3]
    $region5: #{tpu_custom_call.1} parent=1 // pred_fallthru
      _
    // Predicated region
    $region6: #{tpu_custom_call.1} parent=1 // pred_check
      _
    $region7: #{tpu_custom_call.1} parent=1 // pred_check_branch
      %26 = sbr.rel (0) target = $region9
    $region8: #{tpu_custom_call.1} parent=1 // pred_region
      _
    $region9: #{tpu_custom_call.1} parent=1 // pred_fallthru
      _
    // Predicated region
    $region10: #{tpu_custom_call.1} parent=1 // pred_check
      _
    $region11: #{tpu_custom_call.1} parent=1 // pred_check_branch
      %28 = sbr.rel (0) target = $region13
    $region12: #{tpu_custom_call.1} parent=1 // pred_region
      _
    $region13: #{tpu_custom_call.1} parent=1 // pred_fallthru
      _
    // Predicated region
    $region14: #{tpu_custom_call.1} parent=1 // pred_check
      _
    $region15: #{tpu_custom_call.1} parent=1 // pred_check_branch
      %30 = sbr.rel (0) target = $region17
    $region16: #{tpu_custom_call.1} parent=1 // pred_region
      %32 = vsyncadd [#allocation5], 0
      %s33 = sshll.u32 %s3, 4
      %s34 = int_to_ptr.hbm [resolvable:$true] %s33
      %s35 = sshll.u32 [#allocation4], 4
      %s36 = int_to_ptr.vmem [resolvable:$true] %s35
      %41 = dma.hbm_to_vmem [thread:$0]  %s34, 512, %s36, [#allocation5], 128, 128, 8
    $region17: #{tpu_custom_call.1} parent=1 // pred_fallthru
      _
    // Predicated region
    $region18: #{tpu_custom_call.1} parent=1 // pred_check
      _
    $region19: #{tpu_custom_call.1} parent=1 // pred_check_branch
      %43 = sbr.rel (0) target = $region21
    $region20: #{tpu_custom_call.1} parent=1 // pred_region
      _
    $region21: #{tpu_custom_call.1} parent=1 // pred_fallthru
      _
    // Predicated region
    $region22: #{tpu_custom_call.1} parent=1 // pred_check
      _
    $region23: #{tpu_custom_call.1} parent=1 // pred_check_branch
      %45 = sbr.rel (0) target = $region25
    $region24: #{tpu_custom_call.1} parent=1 // pred_region
      _
    $region25: #{tpu_custom_call.1} parent=1 // pred_fallthru
      _
    // Predicated region
    $region26: #{tpu_custom_call.1} parent=1 // pred_check
      _
    $region27: #{tpu_custom_call.1} parent=1 // pred_check_branch
      %47 = sbr.rel (0) target = $region29
    $region28: #{tpu_custom_call.1} parent=1 // pred_region
      _
    $region29: #{tpu_custom_call.1} parent=1 // pred_fallthru
      _
    // Predicated region
    $region30: #{tpu_custom_call.1} parent=1 // pred_check
      _
    $region31: #{tpu_custom_call.1} parent=1 // pred_check_branch
      %49 = sbr.rel (0) target = $region33
    $region32: #{tpu_custom_call.1} parent=1 // pred_region
      %51 = dma.done [#allocation3], 128
    $region33: #{tpu_custom_call.1} parent=1 // pred_fallthru
      _
    // Predicated region
    $region34: #{tpu_custom_call.1} parent=1 // pred_check
      _
    $region35: #{tpu_custom_call.1} parent=1 // pred_check_branch
      %53 = sbr.rel (0) target = $region37
    $region36: #{tpu_custom_call.1} parent=1 // pred_region
      %55 = dma.done [#allocation5], 512
    $region37: #{tpu_custom_call.1} parent=1 // pred_fallthru
      _
    %v56 = vld [vmem:[#allocation2] sm:$0xff]
    %v57 = vld [vmem:[%s1] sm:$0xff]
    %v58 = vld [vmem:[%s1 + $0x8] sm:$0xff]
    %v59 = vld [vmem:[%s1 + $0x10] sm:$0xff]
    %v60 = vld [vmem:[%s1 + $0x18] sm:$0xff]
    %v61 = vld [vmem:[%s2] sm:$0x1]
    %v63 = vperm.slane %v61, 0
    %vm65 = vcmask 261120
    %v67 = vsel %vm65, %v56, 0
    %69 = vmatpush.msra.mxu0 0.0
    %70 = vmatpush.msra.mxu0 0.0
    %71 = vmatpush.msra.mxu0 0.0
    %72 = vmatpush.msra.mxu0 0.0
    %73 = vmatpush.msra.mxu0 0.0
    %74 = vmatpush.msra.mxu0 0.0
    %75 = vmatpush.msra.mxu0 0.0
    %76 = vmatpush.msra.mxu0 0.0
    %77 = vmatpush.msra.mxu0 0.0
    %78 = vmatpush.msra.mxu0 0.0
    %79 = vmatpush.msra.mxu0 0.0
    %80 = vmatpush.msra.mxu0 0.0
    %v81 = vand.u32 %v60, 4294901760
    %82 = vmatpush.msra.mxu0 %v81
    %v83 = vand.u32 %v59, 4294901760
    %84 = vmatpush.msra.mxu0 %v83
    %v85 = vand.u32 %v58, 4294901760
    %86 = vmatpush.msra.mxu0 %v85
    %v87 = vand.u32 %v57, 4294901760
    %88 = vmatpush.msra.mxu0 %v87
    %v89 = vand.u32 %v67, 4294901760
    %v90 = vsub.f32 %v67, %v89
    %v91 = vand.u32 %v90, 4294901760
    %v92 = vsub.f32 %v90, %v91
    %v93 = vand.u32 %v92, 4294901760
    %94 = vmatmul.f32.gmra.mxu0 %v93
    %v95 = vpop.f32.mrf.mxu0
    %v96 = vadd.f32 %v63, %v95
    %97 = vdwg.mxu0
    %98 = vmatpush.msra.mxu0 0.0
    %99 = vmatpush.msra.mxu0 0.0
    %100 = vmatpush.msra.mxu0 0.0
    %101 = vmatpush.msra.mxu0 0.0
    %102 = vmatpush.msra.mxu0 0.0
    %103 = vmatpush.msra.mxu0 0.0
    %104 = vmatpush.msra.mxu0 0.0
    %105 = vmatpush.msra.mxu0 0.0
    %106 = vmatpush.msra.mxu0 0.0
    %107 = vmatpush.msra.mxu0 0.0
    %108 = vmatpush.msra.mxu0 0.0
    %109 = vmatpush.msra.mxu0 0.0
    %v110 = vand.u32 %v60, 4294901760
    %v111 = vsub.f32 %v60, %v110
    %v112 = vand.u32 %v111, 4294901760
    %v113 = vsub.f32 %v111, %v112
    %v114 = vand.u32 %v113, 4294901760
    %115 = vmatpush.msra.mxu0 %v114
    %v116 = vand.u32 %v59, 4294901760
    %v117 = vsub.f32 %v59, %v116
    %v118 = vand.u32 %v117, 4294901760
    %v119 = vsub.f32 %v117, %v118
    %v120 = vand.u32 %v119, 4294901760
    %121 = vmatpush.msra.mxu0 %v120
    %v122 = vand.u32 %v58, 4294901760
    %v123 = vsub.f32 %v58, %v122
    %v124 = vand.u32 %v123, 4294901760
    %v125 = vsub.f32 %v123, %v124
    %v126 = vand.u32 %v125, 4294901760
    %127 = vmatpush.msra.mxu0 %v126
    %v128 = vand.u32 %v57, 4294901760
    %v129 = vsub.f32 %v57, %v128
    %v130 = vand.u32 %v129, 4294901760
    %v131 = vsub.f32 %v129, %v130
    %v132 = vand.u32 %v131, 4294901760
    %133 = vmatpush.msra.mxu0 %v132
    %v134 = vand.u32 %v67, 4294901760
    %135 = vmatmul.f32.gmra.mxu0 %v134
    %v136 = vpop.f32.mrf.mxu0
    %v137 = vadd.f32 %v96, %v136
    %138 = vdwg.mxu0
    %139 = vmatpush.msra.mxu0 0.0
    %140 = vmatpush.msra.mxu0 0.0
    %141 = vmatpush.msra.mxu0 0.0
    %142 = vmatpush.msra.mxu0 0.0
    %143 = vmatpush.msra.mxu0 0.0
    %144 = vmatpush.msra.mxu0 0.0
    %145 = vmatpush.msra.mxu0 0.0
    %146 = vmatpush.msra.mxu0 0.0
    %147 = vmatpush.msra.mxu0 0.0
    %148 = vmatpush.msra.mxu0 0.0
    %149 = vmatpush.msra.mxu0 0.0
    %150 = vmatpush.msra.mxu0 0.0
    %v151 = vand.u32 %v60, 4294901760
    %v152 = vsub.f32 %v60, %v151
    %153 = vmatpush.msra.mxu0 %v152
    %v154 = vand.u32 %v59, 4294901760
    %v155 = vsub.f32 %v59, %v154
    %156 = vmatpush.msra.mxu0 %v155
    %v157 = vand.u32 %v58, 4294901760
    %v158 = vsub.f32 %v58, %v157
    %159 = vmatpush.msra.mxu0 %v158
    %v160 = vand.u32 %v57, 4294901760
    %v161 = vsub.f32 %v57, %v160
    %162 = vmatpush.msra.mxu0 %v161
    %v163 = vand.u32 %v67, 4294901760
    %v164 = vsub.f32 %v67, %v163
    %165 = vmatmul.f32.gmra.mxu0 %v164
    %v166 = vpop.f32.mrf.mxu0
    %v167 = vadd.f32 %v137, %v166
    %168 = vdwg.mxu0
    %169 = vmatpush.msra.mxu0 0.0
    %170 = vmatpush.msra.mxu0 0.0
    %171 = vmatpush.msra.mxu0 0.0
    %172 = vmatpush.msra.mxu0 0.0
    %173 = vmatpush.msra.mxu0 0.0
    %174 = vmatpush.msra.mxu0 0.0
    %175 = vmatpush.msra.mxu0 0.0
    %176 = vmatpush.msra.mxu0 0.0
    %177 = vmatpush.msra.mxu0 0.0
    %178 = vmatpush.msra.mxu0 0.0
    %179 = vmatpush.msra.mxu0 0.0
    %180 = vmatpush.msra.mxu0 0.0
    %v181 = vand.u32 %v60, 4294901760
    %182 = vmatpush.msra.mxu0 %v181
    %v183 = vand.u32 %v59, 4294901760
    %184 = vmatpush.msra.mxu0 %v183
    %v185 = vand.u32 %v58, 4294901760
    %186 = vmatpush.msra.mxu0 %v185
    %v187 = vand.u32 %v57, 4294901760
    %188 = vmatpush.msra.mxu0 %v187
    %v189 = vand.u32 %v67, 4294901760
    %v190 = vsub.f32 %v67, %v189
    %v191 = vand.u32 %v190, 4294901760
    %192 = vmatmul.f32.gmra.mxu0 %v191
    %v193 = vpop.f32.mrf.mxu0
    %v194 = vadd.f32 %v167, %v193
    %195 = vdwg.mxu0
    %196 = vmatpush.msra.mxu0 0.0
    %197 = vmatpush.msra.mxu0 0.0
    %198 = vmatpush.msra.mxu0 0.0
    %199 = vmatpush.msra.mxu0 0.0
    %200 = vmatpush.msra.mxu0 0.0
    %201 = vmatpush.msra.mxu0 0.0
    %202 = vmatpush.msra.mxu0 0.0
    %203 = vmatpush.msra.mxu0 0.0
    %204 = vmatpush.msra.mxu0 0.0
    %205 = vmatpush.msra.mxu0 0.0
    %206 = vmatpush.msra.mxu0 0.0
    %207 = vmatpush.msra.mxu0 0.0
    %v208 = vand.u32 %v60, 4294901760
    %v209 = vsub.f32 %v60, %v208
    %v210 = vand.u32 %v209, 4294901760
    %211 = vmatpush.msra.mxu0 %v210
    %v212 = vand.u32 %v59, 4294901760
    %v213 = vsub.f32 %v59, %v212
    %v214 = vand.u32 %v213, 4294901760
    %215 = vmatpush.msra.mxu0 %v214
    %v216 = vand.u32 %v58, 4294901760
    %v217 = vsub.f32 %v58, %v216
    %v218 = vand.u32 %v217, 4294901760
    %219 = vmatpush.msra.mxu0 %v218
    %v220 = vand.u32 %v57, 4294901760
    %v221 = vsub.f32 %v57, %v220
    %v222 = vand.u32 %v221, 4294901760
    %223 = vmatpush.msra.mxu0 %v222
    %v224 = vand.u32 %v67, 4294901760
    %225 = vmatmul.f32.gmra.mxu0 %v224
    %v226 = vpop.f32.mrf.mxu0
    %v227 = vadd.f32 %v194, %v226
    %228 = vdwg.mxu0
    %229 = vmatpush.msra.mxu0 0.0
    %230 = vmatpush.msra.mxu0 0.0
    %231 = vmatpush.msra.mxu0 0.0
    %232 = vmatpush.msra.mxu0 0.0
    %233 = vmatpush.msra.mxu0 0.0
    %234 = vmatpush.msra.mxu0 0.0
    %235 = vmatpush.msra.mxu0 0.0
    %236 = vmatpush.msra.mxu0 0.0
    %237 = vmatpush.msra.mxu0 0.0
    %238 = vmatpush.msra.mxu0 0.0
    %239 = vmatpush.msra.mxu0 0.0
    %240 = vmatpush.msra.mxu0 0.0
    %v241 = vand.u32 %v60, 4294901760
    %242 = vmatpush.msra.mxu0 %v241
    %v243 = vand.u32 %v59, 4294901760
    %244 = vmatpush.msra.mxu0 %v243
    %v245 = vand.u32 %v58, 4294901760
    %246 = vmatpush.msra.mxu0 %v245
    %v247 = vand.u32 %v57, 4294901760
    %248 = vmatpush.msra.mxu0 %v247
    %v249 = vand.u32 %v67, 4294901760
    %250 = vmatmul.f32.gmra.mxu0 %v249
    %v251 = vpop.f32.mrf.mxu0
    %v252 = vadd.f32 %v227, %v251
    %253 = vdwg.mxu0
    %v254 = vmax.f32 %v252, 0.0
    %v255 = vld [vmem:[#allocation4] sm:$0xff]
    %v256 = vld [vmem:[#allocation4 + $0x8] sm:$0xff]
    %v257 = vld [vmem:[#allocation4 + $0x10] sm:$0xff]
    %v258 = vld [vmem:[#allocation4 + $0x18] sm:$0xff]
    %v259 = vld [vmem:[%s4] sm:$0x1]
    %v261 = vperm.slane %v259, 0
    %v264 = vsel %vm65, %v254, 0
    %266 = vmatpush.msra.mxu0 0.0
    %267 = vmatpush.msra.mxu0 0.0
    %268 = vmatpush.msra.mxu0 0.0
    %269 = vmatpush.msra.mxu0 0.0
    %270 = vmatpush.msra.mxu0 0.0
    %271 = vmatpush.msra.mxu0 0.0
    %272 = vmatpush.msra.mxu0 0.0
    %273 = vmatpush.msra.mxu0 0.0
    %274 = vmatpush.msra.mxu0 0.0
    %275 = vmatpush.msra.mxu0 0.0
    %276 = vmatpush.msra.mxu0 0.0
    %277 = vmatpush.msra.mxu0 0.0
    %v278 = vand.u32 %v258, 4294901760
    %279 = vmatpush.msra.mxu0 %v278
    %v280 = vand.u32 %v257, 4294901760
    %281 = vmatpush.msra.mxu0 %v280
    %v282 = vand.u32 %v256, 4294901760
    %283 = vmatpush.msra.mxu0 %v282
    %v284 = vand.u32 %v255, 4294901760
    %285 = vmatpush.msra.mxu0 %v284
    %v286 = vand.u32 %v264, 4294901760
    %v287 = vsub.f32 %v264, %v286
    %v288 = vand.u32 %v287, 4294901760
    %v289 = vsub.f32 %v287, %v288
    %v290 = vand.u32 %v289, 4294901760
    %291 = vmatmul.f32.gmra.mxu0 %v290
    %v292 = vpop.f32.mrf.mxu0
    %v293 = vadd.f32 %v261, %v292
    %294 = vdwg.mxu0
    %295 = vmatpush.msra.mxu0 0.0
    %296 = vmatpush.msra.mxu0 0.0
    %297 = vmatpush.msra.mxu0 0.0
    %298 = vmatpush.msra.mxu0 0.0
    %299 = vmatpush.msra.mxu0 0.0
    %300 = vmatpush.msra.mxu0 0.0
    %301 = vmatpush.msra.mxu0 0.0
    %302 = vmatpush.msra.mxu0 0.0
    %303 = vmatpush.msra.mxu0 0.0
    %304 = vmatpush.msra.mxu0 0.0
    %305 = vmatpush.msra.mxu0 0.0
    %306 = vmatpush.msra.mxu0 0.0
    %v307 = vand.u32 %v258, 4294901760
    %v308 = vsub.f32 %v258, %v307
    %v309 = vand.u32 %v308, 4294901760
    %v310 = vsub.f32 %v308, %v309
    %v311 = vand.u32 %v310, 4294901760
    %312 = vmatpush.msra.mxu0 %v311
    %v313 = vand.u32 %v257, 4294901760
    %v314 = vsub.f32 %v257, %v313
    %v315 = vand.u32 %v314, 4294901760
    %v316 = vsub.f32 %v314, %v315
    %v317 = vand.u32 %v316, 4294901760
    %318 = vmatpush.msra.mxu0 %v317
    %v319 = vand.u32 %v256, 4294901760
    %v320 = vsub.f32 %v256, %v319
    %v321 = vand.u32 %v320, 4294901760
    %v322 = vsub.f32 %v320, %v321
    %v323 = vand.u32 %v322, 4294901760
    %324 = vmatpush.msra.mxu0 %v323
    %v325 = vand.u32 %v255, 4294901760
    %v326 = vsub.f32 %v255, %v325
    %v327 = vand.u32 %v326, 4294901760
    %v328 = vsub.f32 %v326, %v327
    %v329 = vand.u32 %v328, 4294901760
    %330 = vmatpush.msra.mxu0 %v329
    %v331 = vand.u32 %v264, 4294901760
    %332 = vmatmul.f32.gmra.mxu0 %v331
    %v333 = vpop.f32.mrf.mxu0
    %v334 = vadd.f32 %v293, %v333
    %335 = vdwg.mxu0
    %336 = vmatpush.msra.mxu0 0.0
    %337 = vmatpush.msra.mxu0 0.0
    %338 = vmatpush.msra.mxu0 0.0
    %339 = vmatpush.msra.mxu0 0.0
    %340 = vmatpush.msra.mxu0 0.0
    %341 = vmatpush.msra.mxu0 0.0
    %342 = vmatpush.msra.mxu0 0.0
    %343 = vmatpush.msra.mxu0 0.0
    %344 = vmatpush.msra.mxu0 0.0
    %345 = vmatpush.msra.mxu0 0.0
    %346 = vmatpush.msra.mxu0 0.0
    %347 = vmatpush.msra.mxu0 0.0
    %v348 = vand.u32 %v258, 4294901760
    %v349 = vsub.f32 %v258, %v348
    %350 = vmatpush.msra.mxu0 %v349
    %v351 = vand.u32 %v257, 4294901760
    %v352 = vsub.f32 %v257, %v351
    %353 = vmatpush.msra.mxu0 %v352
    %v354 = vand.u32 %v256, 4294901760
    %v355 = vsub.f32 %v256, %v354
    %356 = vmatpush.msra.mxu0 %v355
    %v357 = vand.u32 %v255, 4294901760
    %v358 = vsub.f32 %v255, %v357
    %359 = vmatpush.msra.mxu0 %v358
    %v360 = vand.u32 %v264, 4294901760
    %v361 = vsub.f32 %v264, %v360
    %362 = vmatmul.f32.gmra.mxu0 %v361
    %v363 = vpop.f32.mrf.mxu0
    %v364 = vadd.f32 %v334, %v363
    %365 = vdwg.mxu0
    %366 = vmatpush.msra.mxu0 0.0
    %367 = vmatpush.msra.mxu0 0.0
    %368 = vmatpush.msra.mxu0 0.0
    %369 = vmatpush.msra.mxu0 0.0
    %370 = vmatpush.msra.mxu0 0.0
    %371 = vmatpush.msra.mxu0 0.0
    %372 = vmatpush.msra.mxu0 0.0
    %373 = vmatpush.msra.mxu0 0.0
    %374 = vmatpush.msra.mxu0 0.0
    %375 = vmatpush.msra.mxu0 0.0
    %376 = vmatpush.msra.mxu0 0.0
    %377 = vmatpush.msra.mxu0 0.0
    %v378 = vand.u32 %v258, 4294901760
    %379 = vmatpush.msra.mxu0 %v378
    %v380 = vand.u32 %v257, 4294901760
    %381 = vmatpush.msra.mxu0 %v380
    %v382 = vand.u32 %v256, 4294901760
    %383 = vmatpush.msra.mxu0 %v382
    %v384 = vand.u32 %v255, 4294901760
    %385 = vmatpush.msra.mxu0 %v384
    %v386 = vand.u32 %v264, 4294901760
    %v387 = vsub.f32 %v264, %v386
    %v388 = vand.u32 %v387, 4294901760
    %389 = vmatmul.f32.gmra.mxu0 %v388
    %v390 = vpop.f32.mrf.mxu0
    %v391 = vadd.f32 %v364, %v390
    %392 = vdwg.mxu0
    %393 = vmatpush.msra.mxu0 0.0
    %394 = vmatpush.msra.mxu0 0.0
    %395 = vmatpush.msra.mxu0 0.0
    %396 = vmatpush.msra.mxu0 0.0
    %397 = vmatpush.msra.mxu0 0.0
    %398 = vmatpush.msra.mxu0 0.0
    %399 = vmatpush.msra.mxu0 0.0
    %400 = vmatpush.msra.mxu0 0.0
    %401 = vmatpush.msra.mxu0 0.0
    %402 = vmatpush.msra.mxu0 0.0
    %403 = vmatpush.msra.mxu0 0.0
    %404 = vmatpush.msra.mxu0 0.0
    %v405 = vand.u32 %v258, 4294901760
    %v406 = vsub.f32 %v258, %v405
    %v407 = vand.u32 %v406, 4294901760
    %408 = vmatpush.msra.mxu0 %v407
    %v409 = vand.u32 %v257, 4294901760
    %v410 = vsub.f32 %v257, %v409
    %v411 = vand.u32 %v410, 4294901760
    %412 = vmatpush.msra.mxu0 %v411
    %v413 = vand.u32 %v256, 4294901760
    %v414 = vsub.f32 %v256, %v413
    %v415 = vand.u32 %v414, 4294901760
    %416 = vmatpush.msra.mxu0 %v415
    %v417 = vand.u32 %v255, 4294901760
    %v418 = vsub.f32 %v255, %v417
    %v419 = vand.u32 %v418, 4294901760
    %420 = vmatpush.msra.mxu0 %v419
    %v421 = vand.u32 %v264, 4294901760
    %422 = vmatmul.f32.gmra.mxu0 %v421
    %v423 = vpop.f32.mrf.mxu0
    %v424 = vadd.f32 %v391, %v423
    %425 = vdwg.mxu0
    %426 = vmatpush.msra.mxu0 0.0
    %427 = vmatpush.msra.mxu0 0.0
    %428 = vmatpush.msra.mxu0 0.0
    %429 = vmatpush.msra.mxu0 0.0
    %430 = vmatpush.msra.mxu0 0.0
    %431 = vmatpush.msra.mxu0 0.0
    %432 = vmatpush.msra.mxu0 0.0
    %433 = vmatpush.msra.mxu0 0.0
    %434 = vmatpush.msra.mxu0 0.0
    %435 = vmatpush.msra.mxu0 0.0
    %436 = vmatpush.msra.mxu0 0.0
    %437 = vmatpush.msra.mxu0 0.0
    %v438 = vand.u32 %v258, 4294901760
    %439 = vmatpush.msra.mxu0 %v438
    %v440 = vand.u32 %v257, 4294901760
    %441 = vmatpush.msra.mxu0 %v440
    %v442 = vand.u32 %v256, 4294901760
    %443 = vmatpush.msra.mxu0 %v442
    %v444 = vand.u32 %v255, 4294901760
    %445 = vmatpush.msra.mxu0 %v444
    %v446 = vand.u32 %v264, 4294901760
    %447 = vmatmul.f32.gmra.mxu0 %v446
    %v448 = vpop.f32.mrf.mxu0
    %v449 = vadd.f32 %v424, %v448
    %450 = vdwg.mxu0
    %v451 = vmax.f32 %v449, 0.0
    %v452 = vld [vmem:[%s5] sm:$0xff]
    %v453 = vld [vmem:[%s5 + $0x8] sm:$0xff]
    %v454 = vld [vmem:[%s5 + $0x10] sm:$0xff]
    %v455 = vld [vmem:[%s5 + $0x18] sm:$0xff]
    %v456 = vld [vmem:[%s6] sm:$0x1]
    %v458 = vperm.slane %v456, 0
    %v461 = vsel %vm65, %v451, 0
    %463 = vmatpush.msra.mxu0 0.0
    %464 = vmatpush.msra.mxu0 0.0
    %465 = vmatpush.msra.mxu0 0.0
    %466 = vmatpush.msra.mxu0 0.0
    %467 = vmatpush.msra.mxu0 0.0
    %468 = vmatpush.msra.mxu0 0.0
    %469 = vmatpush.msra.mxu0 0.0
    %470 = vmatpush.msra.mxu0 0.0
    %471 = vmatpush.msra.mxu0 0.0
    %472 = vmatpush.msra.mxu0 0.0
    %473 = vmatpush.msra.mxu0 0.0
    %474 = vmatpush.msra.mxu0 0.0
    %v475 = vand.u32 %v455, 4294901760
    %476 = vmatpush.msra.mxu0 %v475
    %v477 = vand.u32 %v454, 4294901760
    %478 = vmatpush.msra.mxu0 %v477
    %v479 = vand.u32 %v453, 4294901760
    %480 = vmatpush.msra.mxu0 %v479
    %v481 = vand.u32 %v452, 4294901760
    %482 = vmatpush.msra.mxu0 %v481
    %v483 = vand.u32 %v461, 4294901760
    %v484 = vsub.f32 %v461, %v483
    %v485 = vand.u32 %v484, 4294901760
    %v486 = vsub.f32 %v484, %v485
    %v487 = vand.u32 %v486, 4294901760
    %488 = vmatmul.f32.gmra.mxu0 %v487
    %v489 = vpop.f32.mrf.mxu0
    %v490 = vadd.f32 %v458, %v489
    %491 = vdwg.mxu0
    %492 = vmatpush.msra.mxu0 0.0
    %493 = vmatpush.msra.mxu0 0.0
    %494 = vmatpush.msra.mxu0 0.0
    %495 = vmatpush.msra.mxu0 0.0
    %496 = vmatpush.msra.mxu0 0.0
    %497 = vmatpush.msra.mxu0 0.0
    %498 = vmatpush.msra.mxu0 0.0
    %499 = vmatpush.msra.mxu0 0.0
    %500 = vmatpush.msra.mxu0 0.0
    %501 = vmatpush.msra.mxu0 0.0
    %502 = vmatpush.msra.mxu0 0.0
    %503 = vmatpush.msra.mxu0 0.0
    %v504 = vand.u32 %v455, 4294901760
    %v505 = vsub.f32 %v455, %v504
    %v506 = vand.u32 %v505, 4294901760
    %v507 = vsub.f32 %v505, %v506
    %v508 = vand.u32 %v507, 4294901760
    %509 = vmatpush.msra.mxu0 %v508
    %v510 = vand.u32 %v454, 4294901760
    %v511 = vsub.f32 %v454, %v510
    %v512 = vand.u32 %v511, 4294901760
    %v513 = vsub.f32 %v511, %v512
    %v514 = vand.u32 %v513, 4294901760
    %515 = vmatpush.msra.mxu0 %v514
    %v516 = vand.u32 %v453, 4294901760
    %v517 = vsub.f32 %v453, %v516
    %v518 = vand.u32 %v517, 4294901760
    %v519 = vsub.f32 %v517, %v518
    %v520 = vand.u32 %v519, 4294901760
    %521 = vmatpush.msra.mxu0 %v520
    %v522 = vand.u32 %v452, 4294901760
    %v523 = vsub.f32 %v452, %v522
    %v524 = vand.u32 %v523, 4294901760
    %v525 = vsub.f32 %v523, %v524
    %v526 = vand.u32 %v525, 4294901760
    %527 = vmatpush.msra.mxu0 %v526
    %v528 = vand.u32 %v461, 4294901760
    %529 = vmatmul.f32.gmra.mxu0 %v528
    %v530 = vpop.f32.mrf.mxu0
    %v531 = vadd.f32 %v490, %v530
    %532 = vdwg.mxu0
    %533 = vmatpush.msra.mxu0 0.0
    %534 = vmatpush.msra.mxu0 0.0
    %535 = vmatpush.msra.mxu0 0.0
    %536 = vmatpush.msra.mxu0 0.0
    %537 = vmatpush.msra.mxu0 0.0
    %538 = vmatpush.msra.mxu0 0.0
    %539 = vmatpush.msra.mxu0 0.0
    %540 = vmatpush.msra.mxu0 0.0
    %541 = vmatpush.msra.mxu0 0.0
    %542 = vmatpush.msra.mxu0 0.0
    %543 = vmatpush.msra.mxu0 0.0
    %544 = vmatpush.msra.mxu0 0.0
    %v545 = vand.u32 %v455, 4294901760
    %v546 = vsub.f32 %v455, %v545
    %547 = vmatpush.msra.mxu0 %v546
    %v548 = vand.u32 %v454, 4294901760
    %v549 = vsub.f32 %v454, %v548
    %550 = vmatpush.msra.mxu0 %v549
    %v551 = vand.u32 %v453, 4294901760
    %v552 = vsub.f32 %v453, %v551
    %553 = vmatpush.msra.mxu0 %v552
    %v554 = vand.u32 %v452, 4294901760
    %v555 = vsub.f32 %v452, %v554
    %556 = vmatpush.msra.mxu0 %v555
    %v557 = vand.u32 %v461, 4294901760
    %v558 = vsub.f32 %v461, %v557
    %559 = vmatmul.f32.gmra.mxu0 %v558
    %v560 = vpop.f32.mrf.mxu0
    %v561 = vadd.f32 %v531, %v560
    %562 = vdwg.mxu0
    %563 = vmatpush.msra.mxu0 0.0
    %564 = vmatpush.msra.mxu0 0.0
    %565 = vmatpush.msra.mxu0 0.0
    %566 = vmatpush.msra.mxu0 0.0
    %567 = vmatpush.msra.mxu0 0.0
    %568 = vmatpush.msra.mxu0 0.0
    %569 = vmatpush.msra.mxu0 0.0
    %570 = vmatpush.msra.mxu0 0.0
    %571 = vmatpush.msra.mxu0 0.0
    %572 = vmatpush.msra.mxu0 0.0
    %573 = vmatpush.msra.mxu0 0.0
    %574 = vmatpush.msra.mxu0 0.0
    %v575 = vand.u32 %v455, 4294901760
    %576 = vmatpush.msra.mxu0 %v575
    %v577 = vand.u32 %v454, 4294901760
    %578 = vmatpush.msra.mxu0 %v577
    %v579 = vand.u32 %v453, 4294901760
    %580 = vmatpush.msra.mxu0 %v579
    %v581 = vand.u32 %v452, 4294901760
    %582 = vmatpush.msra.mxu0 %v581
    %v583 = vand.u32 %v461, 4294901760
    %v584 = vsub.f32 %v461, %v583
    %v585 = vand.u32 %v584, 4294901760
    %586 = vmatmul.f32.gmra.mxu0 %v585
    %v587 = vpop.f32.mrf.mxu0
    %v588 = vadd.f32 %v561, %v587
    %589 = vdwg.mxu0
    %590 = vmatpush.msra.mxu0 0.0
    %591 = vmatpush.msra.mxu0 0.0
    %592 = vmatpush.msra.mxu0 0.0
    %593 = vmatpush.msra.mxu0 0.0
    %594 = vmatpush.msra.mxu0 0.0
    %595 = vmatpush.msra.mxu0 0.0
    %596 = vmatpush.msra.mxu0 0.0
    %597 = vmatpush.msra.mxu0 0.0
    %598 = vmatpush.msra.mxu0 0.0
    %599 = vmatpush.msra.mxu0 0.0
    %600 = vmatpush.msra.mxu0 0.0
    %601 = vmatpush.msra.mxu0 0.0
    %v602 = vand.u32 %v455, 4294901760
    %v603 = vsub.f32 %v455, %v602
    %v604 = vand.u32 %v603, 4294901760
    %605 = vmatpush.msra.mxu0 %v604
    %v606 = vand.u32 %v454, 4294901760
    %v607 = vsub.f32 %v454, %v606
    %v608 = vand.u32 %v607, 4294901760
    %609 = vmatpush.msra.mxu0 %v608
    %v610 = vand.u32 %v453, 4294901760
    %v611 = vsub.f32 %v453, %v610
    %v612 = vand.u32 %v611, 4294901760
    %613 = vmatpush.msra.mxu0 %v612
    %v614 = vand.u32 %v452, 4294901760
    %v615 = vsub.f32 %v452, %v614
    %v616 = vand.u32 %v615, 4294901760
    %617 = vmatpush.msra.mxu0 %v616
    %v618 = vand.u32 %v461, 4294901760
    %619 = vmatmul.f32.gmra.mxu0 %v618
    %v620 = vpop.f32.mrf.mxu0
    %v621 = vadd.f32 %v588, %v620
    %622 = vdwg.mxu0
    %623 = vmatpush.msra.mxu0 0.0
    %624 = vmatpush.msra.mxu0 0.0
    %625 = vmatpush.msra.mxu0 0.0
    %626 = vmatpush.msra.mxu0 0.0
    %627 = vmatpush.msra.mxu0 0.0
    %628 = vmatpush.msra.mxu0 0.0
    %629 = vmatpush.msra.mxu0 0.0
    %630 = vmatpush.msra.mxu0 0.0
    %631 = vmatpush.msra.mxu0 0.0
    %632 = vmatpush.msra.mxu0 0.0
    %633 = vmatpush.msra.mxu0 0.0
    %634 = vmatpush.msra.mxu0 0.0
    %v635 = vand.u32 %v455, 4294901760
    %636 = vmatpush.msra.mxu0 %v635
    %v637 = vand.u32 %v454, 4294901760
    %638 = vmatpush.msra.mxu0 %v637
    %v639 = vand.u32 %v453, 4294901760
    %640 = vmatpush.msra.mxu0 %v639
    %v641 = vand.u32 %v452, 4294901760
    %642 = vmatpush.msra.mxu0 %v641
    %v643 = vand.u32 %v461, 4294901760
    %644 = vmatmul.f32.gmra.mxu0 %v643
    %v645 = vpop.f32.mrf.mxu0
    %v646 = vadd.f32 %v621, %v645
    %647 = vdwg.mxu0
    %v648 = vxor.u32 %v646, 2147483648
    %v649 = vmul.f32 %v648, 1.442695
    %v650 = vpow.pop %v649
    %v651 = vadd.f32 %v650, 1.0
    %v652 = vrcp.pop %v651
    %v653 = vmul.f32 %v651, %v652
    %v654 = vsub.f32 1.0, %v653
    %v655 = vmul.f32 %v652, %v654
    %v656 = vadd.f32 %v652, %v655
    %vm657 = vweird.f32 %v651
    %vm658 = vweird.f32 %v652
    %vm659 = vmor %vm657, %vm658
    %v660 = vsel %vm659, %v652, %v656
    %v661 = vand.u32 2147483647, %v651
    %vm662 = vcmp.eq.f32.partialorder %v661, 8.507059e+37
    %v663 = vand.u32 %v651, 2147483648
    %v664 = vor.u32 1.1754944e-38, %v663
    %v665 = vsel %vm662, %v664, %v660
    %v666 = vmul.f32 1.0, %v665
    %vm667 = vcmask 31744
    %668 = vst.msk [vmem:[%s7] sm:$0xff] %vm667, %v666
    // Predicated region
    $region38: #{tpu_custom_call.1} parent=1 // pred_check
      _
    $region39: #{tpu_custom_call.1} parent=1 // pred_check_branch
      %670 = sbr.rel (0) target = $region41
    $region40: #{tpu_custom_call.1} parent=1 // pred_region
      _
    $region41: #{tpu_custom_call.1} parent=1 // pred_fallthru
      _
    // Predicated region
    $region42: #{tpu_custom_call.1} parent=1 // pred_check
      _
    $region43: #{tpu_custom_call.1} parent=1 // pred_check_branch
      %672 = sbr.rel (0) target = $region45
    $region44: #{tpu_custom_call.1} parent=1 // pred_region
      _
    $region45: #{tpu_custom_call.1} parent=1 // pred_fallthru
      _
    %673 = vsyncpa [#allocation3], 1
    %674 = vsyncpa [#allocation5], 1

</llo_original>
